<compile_context>
chip_gen: v5e
topology: v5e:2x2
jax: 0.10.0
libtpu: 0.0.40
codegen_flags: <defaults>
</compile_context>

<pallas_src>
import functools

import jax
import jax.numpy as jnp
from jax.experimental import pallas as pl
from jax.experimental.pallas import tpu as pltpu


# ----------------------------- math helpers -----------------------------

def _elu_plus_one(x):
    # elu(x) + 1 == x + 1 for x > 0, exp(x) for x <= 0  (alpha = 1)
    return jnp.where(x > 0, x + 1.0, jnp.exp(jnp.minimum(x, 0.0)))


def _layer_norm_1pass(y, gamma, beta, eps=1e-5):
    # single-pass variance: both cross-lane reductions issue back-to-back
    mean = jnp.mean(y, axis=-1, keepdims=True)
    msq = jnp.mean(y * y, axis=-1, keepdims=True)
    var = msq - mean * mean
    return (y - mean) * jax.lax.rsqrt(var + eps) * gamma + beta


# ------------------------------ Pallas kernel ------------------------------

def _refine_kernel(n_layers, n_batch, seq_len,
                   x_ref, cos2_ref, sin2_ref, hmask_ref,
                   wall_ref, wm_ref, w1x_ref, w1m_ref, w2_ref,
                   g1_ref, b1_ref, g2_ref, b2_ref,
                   o_ref):
    NL, C = x_ref.shape
    N, L = n_batch, seq_len
    inv_L = 1.0 / float(L)
    eps_attn = 1e-6

    x = x_ref[...]            # [NL, C]  activations, resident across layers
    cos2 = cos2_ref[...]      # [NL, 2C] = [cos | cos]
    sin2 = sin2_ref[...]      # [NL, 2C] = [sin | sin]
    H = hmask_ref[...]        # [C, C]   block-diagonal head mask

    for layer in range(n_layers):          # static unroll; weights stay in VMEM
        # ---- fused q/k/v projection + RoPE rotate-half: one wide matmul ----
        # wall[layer] = [Wq | Wk | Wq@R | Wk@R | Wv]  -> p: [NL, 5C]
        p = jnp.dot(x, wall_ref[layer], preferred_element_type=jnp.float32)
        qk = p[:, :2 * C] * cos2 + p[:, 2 * C:4 * C] * sin2   # [NL, 2C] roped q|k
        v = p[:, 4 * C:]                                      # [NL, C]

        qkf = _elu_plus_one(qk)
        qf = qkf[:, :C]
        kf = qkf[:, C:]

        # ---- linear attention: 2D matmuls only, head structure via H ----
        nums, dens = [], []
        for b in range(N):                 # static unroll over batch elements
            rows = slice(b * L, (b + 1) * L)
            qf_b = qf[rows, :]             # [L, C]
            kf_b = kf[rows, :]             # [L, C]
            vs_b = v[rows, :] * inv_L      # [L, C]  (values / v_length)

            # KV[d, e] = sum_s K[s, d] V[s, e], restricted to same-head blocks
            kv_b = jax.lax.dot_general(
                kf_b, vs_b, (((0,), (0,)), ((), ())),
                preferred_element_type=jnp.float32) * H        # [C, C]
            nums.append(jnp.dot(qf_b, kv_b,
                                preferred_element_type=jnp.float32))  # [L, C]

            ksum_b = jnp.sum(kf_b, axis=0, keepdims=True)      # [1, C]
            dens.append(qf_b * ksum_b)                         # [L, C]

        num = jnp.concatenate(nums, axis=0)                    # [NL, C]
        # hoisted denominator matmul: one [NL, C] @ [C, C]
        denom = jnp.dot(jnp.concatenate(dens, axis=0), H,
                        preferred_element_type=jnp.float32)    # [NL, C]
        message = num * (float(L) / (denom + eps_attn))

        # ---- merge + norm1 ----
        message = jnp.dot(message, wm_ref[layer],
                          preferred_element_type=jnp.float32)
        message = _layer_norm_1pass(message, g1_ref[layer], b1_ref[layer])

        # ---- mlp(cat[x, message]) without the lane concat + norm2 ----
        h1 = (jnp.dot(x, w1x_ref[layer], preferred_element_type=jnp.float32)
              + jnp.dot(message, w1m_ref[layer],
                        preferred_element_type=jnp.float32))
        h1 = jnp.maximum(h1, 0.0)
        message = jnp.dot(h1, w2_ref[layer],
                          preferred_element_type=jnp.float32)
        message = _layer_norm_1pass(message, g2_ref[layer], b2_ref[layer])

        x = x + message

    o_ref[...] = x


# --------------------------------- wrapper ----------------------------------

def refine_transformer(feat0, pos_encoding, packed_params, nhead):
    """RefineTransformer.forward — all layers + whole batch in one pallas_call.

    feat0:        [N, L, C] float32
    pos_encoding: [N, L, C, 2] rotary PE (the tensor passed as `mask0`/x_pe in
                  the torch forward)
    """
    del nhead  # head structure is baked into packed_params['hmask']
    N, L, C = feat0.shape
    NL = N * L
    n_layers = packed_params['w_all'].shape[0]

    x = feat0.reshape(NL, C).astype(jnp.float32)
    cos = pos_encoding[..., 0].reshape(NL, C).astype(jnp.float32)
    sin = pos_encoding[..., 1].reshape(NL, C).astype(jnp.float32)
    cos2 = jnp.concatenate([cos, cos], axis=-1)   # [NL, 2C] for the fused q|k
    sin2 = jnp.concatenate([sin, sin], axis=-1)

    kernel = functools.partial(_refine_kernel, n_layers, N, L)

    def full(shape):
        return pl.BlockSpec(shape, lambda i, _s=len(shape): (0,) * _s)

    in_specs = [
        full((NL, C)),                      # x (flattened batch)
        full((NL, 2 * C)),                  # cos2
        full((NL, 2 * C)),                  # sin2
        full((C, C)),                       # block-diagonal head mask
        full((n_layers, C, 5 * C)),         # packed [Wq|Wk|WqR|WkR|Wv]
        full((n_layers, C, C)),             # merge
        full((n_layers, C, 2 * C)),         # mlp W1 (x half)
        full((n_layers, C, 2 * C)),         # mlp W1 (message half)
        full((n_layers, 2 * C, C)),         # mlp W2
        full((n_layers, 1, C)), full((n_layers, 1, C)),   # ln1 gamma, beta
        full((n_layers, 1, C)), full((n_layers, 1, C)),   # ln2 gamma, beta
    ]

    out = pl.pallas_call(
        kernel,
        out_shape=jax.ShapeDtypeStruct((NL, C), jnp.float32),
        grid_spec=pltpu.PrefetchScalarGridSpec(
            num_scalar_prefetch=0,
            grid=(1,),                      # single grid step: everything in VMEM
            in_specs=in_specs,
            out_specs=full((NL, C)),
        ),
        compiler_params=pltpu.CompilerParams(
            dimension_semantics=("arbitrary",)),
    )(x, cos2, sin2,
      packed_params['hmask'],
      packed_params['w_all'], packed_params['w_m'],
      packed_params['w1x'], packed_params['w1m'], packed_params['w2'],
      packed_params['g1'], packed_params['b1'],
      packed_params['g2'], packed_params['b2'])
    return out.reshape(N, L, C)


# ------------------------- parameter init & packing -------------------------

def _xavier_uniform(key, out_f, in_f):
    bound = (6.0 / (in_f + out_f)) ** 0.5
    return jax.random.uniform(key, (out_f, in_f), jnp.float32, -bound, bound)


def _rotate_half_matrix(C):
    # x @ R == interleave(-x[..., 1::2], x[..., ::2])
    R = jnp.zeros((C, C), jnp.float32)
    idx = jnp.arange(C // 2)
    R = R.at[2 * idx + 1, 2 * idx].set(-1.0)
    R = R.at[2 * idx, 2 * idx + 1].set(1.0)
    return R


def init_layer_params(key, d_model):
    """Raw torch-layout parameters ([out, in] Linear weights) for one layer."""
    C = d_model
    ks = jax.random.split(key, 6)
    return dict(
        wq=_xavier_uniform(ks[0], C, C),
        wk=_xavier_uniform(ks[1], C, C),
        wv=_xavier_uniform(ks[2], C, C),
        wm=_xavier_uniform(ks[3], C, C),
        w1=_xavier_uniform(ks[4], 2 * C, 2 * C),
        w2=_xavier_uniform(ks[5], C, 2 * C),
        g1=jnp.ones((C,), jnp.float32), b1=jnp.zeros((C,), jnp.float32),
        g2=jnp.ones((C,), jnp.float32), b2=jnp.zeros((C,), jnp.float32),
    )


def pack_params(layers_raw, d_model, nhead):
    """Pack per-layer torch weights into stacked, kernel-friendly slabs."""
    C = d_model
    D = C // nhead
    rot = _rotate_half_matrix(C)
    head_id = jnp.arange(C) // D
    hmask = (head_id[:, None] == head_id[None, :]).astype(jnp.float32)

    w_all, w_m, w1x, w1m, w2 = [], [], [], [], []
    g1, b1, g2, b2 = [], [], [], []
    for p in layers_raw:
        wq_t, wk_t, wv_t = p['wq'].T, p['wk'].T, p['wv'].T
        # fused projection + rotate-half: [Wq | Wk | Wq@R | Wk@R | Wv] : [C, 5C]
        w_all.append(jnp.concatenate(
            [wq_t, wk_t, wq_t @ rot, wk_t @ rot, wv_t], axis=1))
        w_m.append(p['wm'].T)
        w1_t = p['w1'].T                     # [2C, 2C]; rows [:C] hit x, [C:] msg
        w1x.append(w1_t[:C, :])
        w1m.append(w1_t[C:, :])
        w2.append(p['w2'].T)                 # [2C, C]
        g1.append(p['g1'][None, :]); b1.append(p['b1'][None, :])
        g2.append(p['g2'][None, :]); b2.append(p['b2'][None, :])

    stack = lambda xs: jnp.stack(xs, axis=0)
    return dict(hmask=hmask, w_all=stack(w_all), w_m=stack(w_m),
                w1x=stack(w1x), w1m=stack(w1m), w2=stack(w2),
                g1=stack(g1), b1=stack(b1), g2=stack(g2), b2=stack(b2))


# ----------------------------- pure-JAX reference ----------------------------

def _ref_layer_norm(y, gamma, beta, eps=1e-5):
    mean = jnp.mean(y, axis=-1, keepdims=True)
    var = jnp.mean((y - mean) ** 2, axis=-1, keepdims=True)
    return (y - mean) * jax.lax.rsqrt(var + eps) * gamma + beta


def _ref_encoder_layer(x, cos, sin, p, nhead):
    N, L, C = x.shape
    D = C // nhead
    rot = _rotate_half_matrix(C)
    q = x @ p['wq'].T
    k = x @ p['wk'].T
    v = x @ p['wv'].T
    q = q * cos + (q @ rot) * sin
    k = k * cos + (k @ rot) * sin
    Q = _elu_plus_one(q).reshape(N, L, nhead, D)
    K = _elu_plus_one(k).reshape(N, L, nhead, D)
    V = v.reshape(N, L, nhead, D) / L
    KV = jnp.einsum('nshd,nshv->nhdv', K, V)
    Z = 1.0 / (jnp.einsum('nlhd,nhd->nlh', Q, K.sum(axis=1)) + 1e-6)
    out = jnp.einsum('nlhd,nhdv,nlh->nlhv', Q, KV, Z) * L
    msg = out.reshape(N, L, C) @ p['wm'].T
    msg = _ref_layer_norm(msg, p['g1'], p['b1'])
    h1 = jnp.maximum(jnp.concatenate([x, msg], axis=-1) @ p['w1'].T, 0.0)
    msg = h1 @ p['w2'].T
    msg = _ref_layer_norm(msg, p['g2'], p['b2'])
    return x + msg


def _ref_refine_transformer(feat0, pe, layers_raw, nhead):
    cos, sin = pe[..., 0], pe[..., 1]
    out = feat0
    for p in layers_raw:
        out = _ref_encoder_layer(out, cos, sin, p, nhead)
    return out


# ----------------------------------- main -----------------------------------

if __name__ == "__main__":
    # config = {'d_model': 32, 'nhead': 4, 'layer_names': ['self', 'self'],
    #           'attention': 'linear'}
    N, L, C, nhead = 2, 16, 32, 4
    n_layers = 2

    root = jax.random.PRNGKey(0)
    k_feat, k_params = jax.random.split(root)

    feat0 = jax.random.normal(k_feat, (N, L, C), jnp.float32)

    # rotary positional encoding [N, L, C, 2] (paired channels share an angle);
    # this is the tensor RefineTransformer.forward passes through as x_pe.
    pos = jnp.arange(L, dtype=jnp.float32)
    inv_freq = 1.0 / (10000.0 ** (jnp.arange(C // 2, dtype=jnp.float32) / (C // 2)))
    theta = pos[:, None] * inv_freq[None, :]                     # [L, C//2]
    cos = jnp.repeat(jnp.cos(theta), 2, axis=-1)                 # [L, C]
    sin = jnp.repeat(jnp.sin(theta), 2, axis=-1)                 # [L, C]
    pe = jnp.broadcast_to(jnp.stack([cos, sin], axis=-1), (N, L, C, 2))

    layer_keys = jax.random.split(k_params, n_layers)
    layers_raw = [init_layer_params(k, C) for k in layer_keys]
    packed = pack_params(layers_raw, C, nhead)

    out = refine_transformer(feat0, pe, packed, nhead)
    out = jax.block_until_ready(out)

    # reference at full f32 matmul precision to make the tolerance check robust
    with jax.default_matmul_precision('highest'):
        ref = jax.block_until_ready(
            _ref_refine_transformer(feat0, pe, layers_raw, nhead))

    assert out.shape == (N, L, C)
    assert bool(jnp.all(jnp.isfinite(out)))
    assert bool(jnp.allclose(out, ref, atol=1e-2, rtol=1e-2)), "mismatch vs reference"

    print("KERNEL_OK")
</pallas_src>

<mosaic_0001>
module attributes {stable_mosaic.version = 11 : i64} {
  func.func @_refine_kernel(%arg0: i32, %arg1: memref<32x32xf32, #tpu.memory_space<vmem>>, %arg2: memref<32x64xf32, #tpu.memory_space<vmem>>, %arg3: memref<32x64xf32, #tpu.memory_space<vmem>>, %arg4: memref<32x32xf32, #tpu.memory_space<vmem>>, %arg5: memref<2x32x160xf32, #tpu.memory_space<vmem>>, %arg6: memref<2x32x32xf32, #tpu.memory_space<vmem>>, %arg7: memref<2x32x64xf32, #tpu.memory_space<vmem>>, %arg8: memref<2x32x64xf32, #tpu.memory_space<vmem>>, %arg9: memref<2x64x32xf32, #tpu.memory_space<vmem>>, %arg10: memref<2x1x32xf32, #tpu.memory_space<vmem>>, %arg11: memref<2x1x32xf32, #tpu.memory_space<vmem>>, %arg12: memref<2x1x32xf32, #tpu.memory_space<vmem>>, %arg13: memref<2x1x32xf32, #tpu.memory_space<vmem>>, %arg14: memref<32x32xf32, #tpu.memory_space<vmem>>) attributes {dimension_semantics = [#tpu.dimension_semantics<arbitrary>], iteration_bounds = array<i64: 1>, scalar_prefetch = 0 : i64, scratch_operands = 0 : i64, tpu.core_type = #tpu.core_type<tc>, window_params = [{pipeline_mode = #tpu.pipeline_mode<synchronous>, transform_indices = @transform_0, window_bounds = array<i64: 32, 32>}, {pipeline_mode = #tpu.pipeline_mode<synchronous>, transform_indices = @transform_1, window_bounds = array<i64: 32, 64>}, {pipeline_mode = #tpu.pipeline_mode<synchronous>, transform_indices = @transform_2, window_bounds = array<i64: 32, 64>}, {pipeline_mode = #tpu.pipeline_mode<synchronous>, transform_indices = @transform_3, window_bounds = array<i64: 32, 32>}, {pipeline_mode = #tpu.pipeline_mode<synchronous>, transform_indices = @transform_4, window_bounds = array<i64: 2, 32, 160>}, {pipeline_mode = #tpu.pipeline_mode<synchronous>, transform_indices = @transform_5, window_bounds = array<i64: 2, 32, 32>}, {pipeline_mode = #tpu.pipeline_mode<synchronous>, transform_indices = @transform_6, window_bounds = array<i64: 2, 32, 64>}, {pipeline_mode = #tpu.pipeline_mode<synchronous>, transform_indices = @transform_7, window_bounds = array<i64: 2, 32, 64>}, {pipeline_mode = #tpu.pipeline_mode<synchronous>, transform_indices = @transform_8, window_bounds = array<i64: 2, 64, 32>}, {pipeline_mode = #tpu.pipeline_mode<synchronous>, transform_indices = @transform_9, window_bounds = array<i64: 2, 1, 32>}, {pipeline_mode = #tpu.pipeline_mode<synchronous>, transform_indices = @transform_10, window_bounds = array<i64: 2, 1, 32>}, {pipeline_mode = #tpu.pipeline_mode<synchronous>, transform_indices = @transform_11, window_bounds = array<i64: 2, 1, 32>}, {pipeline_mode = #tpu.pipeline_mode<synchronous>, transform_indices = @transform_12, window_bounds = array<i64: 2, 1, 32>}, {pipeline_mode = #tpu.pipeline_mode<synchronous>, transform_indices = @transform_13, window_bounds = array<i64: 32, 32>}]} {
    %c0 = arith.constant 0 : index
    %c0_0 = arith.constant 0 : index
    %0 = vector.load %arg1[%c0, %c0_0] : memref<32x32xf32, #tpu.memory_space<vmem>>, vector<32x32xf32>
    %c0_1 = arith.constant 0 : index
    %c0_2 = arith.constant 0 : index
    %1 = vector.load %arg2[%c0_1, %c0_2] : memref<32x64xf32, #tpu.memory_space<vmem>>, vector<32x64xf32>
    %c0_3 = arith.constant 0 : index
    %c0_4 = arith.constant 0 : index
    %2 = vector.load %arg3[%c0_3, %c0_4] : memref<32x64xf32, #tpu.memory_space<vmem>>, vector<32x64xf32>
    %c0_5 = arith.constant 0 : index
    %c0_6 = arith.constant 0 : index
    %3 = vector.load %arg4[%c0_5, %c0_6] : memref<32x32xf32, #tpu.memory_space<vmem>>, vector<32x32xf32>
    %c0_7 = arith.constant 0 : index
    %c0_8 = arith.constant 0 : index
    %c0_9 = arith.constant 0 : index
    %4 = vector.load %arg5[%c0_7, %c0_8, %c0_9] : memref<2x32x160xf32, #tpu.memory_space<vmem>>, vector<1x32x160xf32>
    %5 = vector.shape_cast %4 : vector<1x32x160xf32> to vector<32x160xf32>
    %cst = arith.constant dense<0.000000e+00> : vector<32x160xf32>
    %6 = tpu.matmul %0, %5, %cst {dimension_numbers = #tpu.dot_dimension_numbers<[1], [0], [0], [1], [0, 0, 1, 1], [], []>} : vector<32x32xf32>, vector<32x160xf32>, vector<32x160xf32> -> vector<32x160xf32>
    %7 = vector.extract_strided_slice %6 {offsets = [0, 0], sizes = [32, 64], strides = [1, 1]} : vector<32x160xf32> to vector<32x64xf32>
    %8 = arith.mulf %7, %1 : vector<32x64xf32>
    %9 = vector.extract_strided_slice %6 {offsets = [0, 64], sizes = [32, 64], strides = [1, 1]} : vector<32x160xf32> to vector<32x64xf32>
    %10 = arith.mulf %9, %2 : vector<32x64xf32>
    %11 = arith.addf %8, %10 : vector<32x64xf32>
    %12 = vector.extract_strided_slice %6 {offsets = [0, 128], sizes = [32, 32], strides = [1, 1]} : vector<32x160xf32> to vector<32x32xf32>
    %cst_10 = arith.constant 0.000000e+00 : f32
    %13 = vector.broadcast %cst_10 : f32 to vector<32x64xf32>
    %14 = arith.cmpf ogt, %11, %13 : vector<32x64xf32>
    %cst_11 = arith.constant 1.000000e+00 : f32
    %15 = vector.broadcast %cst_11 : f32 to vector<32x64xf32>
    %16 = arith.addf %11, %15 : vector<32x64xf32>
    %cst_12 = arith.constant 0.000000e+00 : f32
    %17 = vector.broadcast %cst_12 : f32 to vector<32x64xf32>
    %18 = arith.minimumf %11, %17 : vector<32x64xf32>
    %19 = math.exp %18 : vector<32x64xf32>
    %20 = arith.select %14, %16, %19 : vector<32x64xi1>, vector<32x64xf32>
    %21 = vector.extract_strided_slice %20 {offsets = [0, 0], sizes = [32, 32], strides = [1, 1]} : vector<32x64xf32> to vector<32x32xf32>
    %22 = vector.extract_strided_slice %20 {offsets = [0, 32], sizes = [32, 32], strides = [1, 1]} : vector<32x64xf32> to vector<32x32xf32>
    %23 = vector.extract_strided_slice %21 {offsets = [0, 0], sizes = [16, 32], strides = [1, 1]} : vector<32x32xf32> to vector<16x32xf32>
    %24 = vector.extract_strided_slice %22 {offsets = [0, 0], sizes = [16, 32], strides = [1, 1]} : vector<32x32xf32> to vector<16x32xf32>
    %25 = vector.extract_strided_slice %12 {offsets = [0, 0], sizes = [16, 32], strides = [1, 1]} : vector<32x32xf32> to vector<16x32xf32>
    %cst_13 = arith.constant 6.250000e-02 : f32
    %26 = vector.broadcast %cst_13 : f32 to vector<16x32xf32>
    %27 = arith.mulf %25, %26 : vector<16x32xf32>
    %cst_14 = arith.constant dense<0.000000e+00> : vector<32x32xf32>
    %28 = tpu.matmul %24, %27, %cst_14 {dimension_numbers = #tpu.dot_dimension_numbers<[0], [0], [1], [1], [0, 1, 1, 1], [], []>} : vector<16x32xf32>, vector<16x32xf32>, vector<32x32xf32> -> vector<32x32xf32>
    %29 = arith.mulf %28, %3 : vector<32x32xf32>
    %cst_15 = arith.constant dense<0.000000e+00> : vector<16x32xf32>
    %30 = tpu.matmul %23, %29, %cst_15 {dimension_numbers = #tpu.dot_dimension_numbers<[1], [0], [0], [1], [0, 0, 1, 1], [], []>} : vector<16x32xf32>, vector<32x32xf32>, vector<16x32xf32> -> vector<16x32xf32>
    %cst_16 = arith.constant dense<0.000000e+00> : vector<32xf32>
    %31 = vector.multi_reduction <add>, %24, %cst_16 [0] : vector<16x32xf32> to vector<32xf32>
    %32 = vector.shape_cast %31 : vector<32xf32> to vector<1x32xf32>
    %33 = vector.broadcast %32 : vector<1x32xf32> to vector<16x32xf32>
    %34 = arith.mulf %23, %33 : vector<16x32xf32>
    %35 = vector.extract_strided_slice %21 {offsets = [16, 0], sizes = [16, 32], strides = [1, 1]} : vector<32x32xf32> to vector<16x32xf32>
    %36 = vector.extract_strided_slice %22 {offsets = [16, 0], sizes = [16, 32], strides = [1, 1]} : vector<32x32xf32> to vector<16x32xf32>
    %37 = vector.extract_strided_slice %12 {offsets = [16, 0], sizes = [16, 32], strides = [1, 1]} : vector<32x32xf32> to vector<16x32xf32>
    %cst_17 = arith.constant 6.250000e-02 : f32
    %38 = vector.broadcast %cst_17 : f32 to vector<16x32xf32>
    %39 = arith.mulf %37, %38 : vector<16x32xf32>
    %cst_18 = arith.constant dense<0.000000e+00> : vector<32x32xf32>
    %40 = tpu.matmul %36, %39, %cst_18 {dimension_numbers = #tpu.dot_dimension_numbers<[0], [0], [1], [1], [0, 1, 1, 1], [], []>} : vector<16x32xf32>, vector<16x32xf32>, vector<32x32xf32> -> vector<32x32xf32>
    %41 = arith.mulf %40, %3 : vector<32x32xf32>
    %cst_19 = arith.constant dense<0.000000e+00> : vector<16x32xf32>
    %42 = tpu.matmul %35, %41, %cst_19 {dimension_numbers = #tpu.dot_dimension_numbers<[1], [0], [0], [1], [0, 0, 1, 1], [], []>} : vector<16x32xf32>, vector<32x32xf32>, vector<16x32xf32> -> vector<16x32xf32>
    %cst_20 = arith.constant dense<0.000000e+00> : vector<32xf32>
    %43 = vector.multi_reduction <add>, %36, %cst_20 [0] : vector<16x32xf32> to vector<32xf32>
    %44 = vector.shape_cast %43 : vector<32xf32> to vector<1x32xf32>
    %45 = vector.broadcast %44 : vector<1x32xf32> to vector<16x32xf32>
    %46 = arith.mulf %35, %45 : vector<16x32xf32>
    %47 = tpu.concatenate %30, %42 in 0 : vector<16x32xf32>, vector<16x32xf32> -> vector<32x32xf32>
    %48 = tpu.concatenate %34, %46 in 0 : vector<16x32xf32>, vector<16x32xf32> -> vector<32x32xf32>
    %cst_21 = arith.constant dense<0.000000e+00> : vector<32x32xf32>
    %49 = tpu.matmul %48, %3, %cst_21 {dimension_numbers = #tpu.dot_dimension_numbers<[1], [0], [0], [1], [0, 0, 1, 1], [], []>} : vector<32x32xf32>, vector<32x32xf32>, vector<32x32xf32> -> vector<32x32xf32>
    %cst_22 = arith.constant 9.99999997E-7 : f32
    %50 = vector.broadcast %cst_22 : f32 to vector<32x32xf32>
    %51 = arith.addf %49, %50 : vector<32x32xf32>
    %cst_23 = arith.constant 1.600000e+01 : f32
    %52 = vector.broadcast %cst_23 : f32 to vector<32x32xf32>
    %53 = arith.divf %52, %51 : vector<32x32xf32>
    %54 = arith.mulf %47, %53 : vector<32x32xf32>
    %c0_24 = arith.constant 0 : index
    %c0_25 = arith.constant 0 : index
    %c0_26 = arith.constant 0 : index
    %55 = vector.load %arg6[%c0_24, %c0_25, %c0_26] : memref<2x32x32xf32, #tpu.memory_space<vmem>>, vector<1x32x32xf32>
    %56 = vector.shape_cast %55 : vector<1x32x32xf32> to vector<32x32xf32>
    %cst_27 = arith.constant dense<0.000000e+00> : vector<32x32xf32>
    %57 = tpu.matmul %54, %56, %cst_27 {dimension_numbers = #tpu.dot_dimension_numbers<[1], [0], [0], [1], [0, 0, 1, 1], [], []>} : vector<32x32xf32>, vector<32x32xf32>, vector<32x32xf32> -> vector<32x32xf32>
    %c0_28 = arith.constant 0 : index
    %c0_29 = arith.constant 0 : index
    %c0_30 = arith.constant 0 : index
    %58 = vector.load %arg10[%c0_28, %c0_29, %c0_30] : memref<2x1x32xf32, #tpu.memory_space<vmem>>, vector<1x1x32xf32>
    %59 = vector.shape_cast %58 : vector<1x1x32xf32> to vector<1x32xf32>
    %c0_31 = arith.constant 0 : index
    %c0_32 = arith.constant 0 : index
    %c0_33 = arith.constant 0 : index
    %60 = vector.load %arg11[%c0_31, %c0_32, %c0_33] : memref<2x1x32xf32, #tpu.memory_space<vmem>>, vector<1x1x32xf32>
    %61 = vector.shape_cast %60 : vector<1x1x32xf32> to vector<1x32xf32>
    %cst_34 = arith.constant dense<0.000000e+00> : vector<32xf32>
    %62 = vector.multi_reduction <add>, %57, %cst_34 [1] : vector<32x32xf32> to vector<32xf32>
    %63 = vector.shape_cast %62 : vector<32xf32> to vector<32x1xf32>
    %cst_35 = arith.constant 3.200000e+01 : f32
    %64 = vector.broadcast %cst_35 : f32 to vector<32x1xf32>
    %65 = arith.divf %63, %64 : vector<32x1xf32>
    %66 = arith.mulf %57, %57 : vector<32x32xf32>
    %cst_36 = arith.constant dense<0.000000e+00> : vector<32xf32>
    %67 = vector.multi_reduction <add>, %66, %cst_36 [1] : vector<32x32xf32> to vector<32xf32>
    %68 = vector.shape_cast %67 : vector<32xf32> to vector<32x1xf32>
    %cst_37 = arith.constant 3.200000e+01 : f32
    %69 = vector.broadcast %cst_37 : f32 to vector<32x1xf32>
    %70 = arith.divf %68, %69 : vector<32x1xf32>
    %71 = arith.mulf %65, %65 : vector<32x1xf32>
    %72 = arith.subf %70, %71 : vector<32x1xf32>
    %73 = vector.broadcast %65 : vector<32x1xf32> to vector<32x32xf32>
    %74 = arith.subf %57, %73 : vector<32x32xf32>
    %cst_38 = arith.constant 9.99999974E-6 : f32
    %75 = vector.broadcast %cst_38 : f32 to vector<32x1xf32>
    %76 = arith.addf %72, %75 : vector<32x1xf32>
    %77 = math.rsqrt %76 : vector<32x1xf32>
    %78 = vector.broadcast %77 : vector<32x1xf32> to vector<32x32xf32>
    %79 = arith.mulf %74, %78 : vector<32x32xf32>
    %80 = vector.broadcast %59 : vector<1x32xf32> to vector<32x32xf32>
    %81 = arith.mulf %79, %80 : vector<32x32xf32>
    %82 = vector.broadcast %61 : vector<1x32xf32> to vector<32x32xf32>
    %83 = arith.addf %81, %82 : vector<32x32xf32>
    %c0_39 = arith.constant 0 : index
    %c0_40 = arith.constant 0 : index
    %c0_41 = arith.constant 0 : index
    %84 = vector.load %arg7[%c0_39, %c0_40, %c0_41] : memref<2x32x64xf32, #tpu.memory_space<vmem>>, vector<1x32x64xf32>
    %85 = vector.shape_cast %84 : vector<1x32x64xf32> to vector<32x64xf32>
    %cst_42 = arith.constant dense<0.000000e+00> : vector<32x64xf32>
    %86 = tpu.matmul %0, %85, %cst_42 {dimension_numbers = #tpu.dot_dimension_numbers<[1], [0], [0], [1], [0, 0, 1, 1], [], []>} : vector<32x32xf32>, vector<32x64xf32>, vector<32x64xf32> -> vector<32x64xf32>
    %c0_43 = arith.constant 0 : index
    %c0_44 = arith.constant 0 : index
    %c0_45 = arith.constant 0 : index
    %87 = vector.load %arg8[%c0_43, %c0_44, %c0_45] : memref<2x32x64xf32, #tpu.memory_space<vmem>>, vector<1x32x64xf32>
    %88 = vector.shape_cast %87 : vector<1x32x64xf32> to vector<32x64xf32>
    %cst_46 = arith.constant dense<0.000000e+00> : vector<32x64xf32>
    %89 = tpu.matmul %83, %88, %cst_46 {dimension_numbers = #tpu.dot_dimension_numbers<[1], [0], [0], [1], [0, 0, 1, 1], [], []>} : vector<32x32xf32>, vector<32x64xf32>, vector<32x64xf32> -> vector<32x64xf32>
    %90 = arith.addf %86, %89 : vector<32x64xf32>
    %cst_47 = arith.constant 0.000000e+00 : f32
    %91 = vector.broadcast %cst_47 : f32 to vector<32x64xf32>
    %92 = arith.maximumf %90, %91 : vector<32x64xf32>
    %c0_48 = arith.constant 0 : index
    %c0_49 = arith.constant 0 : index
    %c0_50 = arith.constant 0 : index
    %93 = vector.load %arg9[%c0_48, %c0_49, %c0_50] : memref<2x64x32xf32, #tpu.memory_space<vmem>>, vector<1x64x32xf32>
    %94 = vector.shape_cast %93 : vector<1x64x32xf32> to vector<64x32xf32>
    %cst_51 = arith.constant dense<0.000000e+00> : vector<32x32xf32>
    %95 = tpu.matmul %92, %94, %cst_51 {dimension_numbers = #tpu.dot_dimension_numbers<[1], [0], [0], [1], [0, 0, 1, 1], [], []>} : vector<32x64xf32>, vector<64x32xf32>, vector<32x32xf32> -> vector<32x32xf32>
    %c0_52 = arith.constant 0 : index
    %c0_53 = arith.constant 0 : index
    %c0_54 = arith.constant 0 : index
    %96 = vector.load %arg12[%c0_52, %c0_53, %c0_54] : memref<2x1x32xf32, #tpu.memory_space<vmem>>, vector<1x1x32xf32>
    %97 = vector.shape_cast %96 : vector<1x1x32xf32> to vector<1x32xf32>
    %c0_55 = arith.constant 0 : index
    %c0_56 = arith.constant 0 : index
    %c0_57 = arith.constant 0 : index
    %98 = vector.load %arg13[%c0_55, %c0_56, %c0_57] : memref<2x1x32xf32, #tpu.memory_space<vmem>>, vector<1x1x32xf32>
    %99 = vector.shape_cast %98 : vector<1x1x32xf32> to vector<1x32xf32>
    %cst_58 = arith.constant dense<0.000000e+00> : vector<32xf32>
    %100 = vector.multi_reduction <add>, %95, %cst_58 [1] : vector<32x32xf32> to vector<32xf32>
    %101 = vector.shape_cast %100 : vector<32xf32> to vector<32x1xf32>
    %cst_59 = arith.constant 3.200000e+01 : f32
    %102 = vector.broadcast %cst_59 : f32 to vector<32x1xf32>
    %103 = arith.divf %101, %102 : vector<32x1xf32>
    %104 = arith.mulf %95, %95 : vector<32x32xf32>
    %cst_60 = arith.constant dense<0.000000e+00> : vector<32xf32>
    %105 = vector.multi_reduction <add>, %104, %cst_60 [1] : vector<32x32xf32> to vector<32xf32>
    %106 = vector.shape_cast %105 : vector<32xf32> to vector<32x1xf32>
    %cst_61 = arith.constant 3.200000e+01 : f32
    %107 = vector.broadcast %cst_61 : f32 to vector<32x1xf32>
    %108 = arith.divf %106, %107 : vector<32x1xf32>
    %109 = arith.mulf %103, %103 : vector<32x1xf32>
    %110 = arith.subf %108, %109 : vector<32x1xf32>
    %111 = vector.broadcast %103 : vector<32x1xf32> to vector<32x32xf32>
    %112 = arith.subf %95, %111 : vector<32x32xf32>
    %cst_62 = arith.constant 9.99999974E-6 : f32
    %113 = vector.broadcast %cst_62 : f32 to vector<32x1xf32>
    %114 = arith.addf %110, %113 : vector<32x1xf32>
    %115 = math.rsqrt %114 : vector<32x1xf32>
    %116 = vector.broadcast %115 : vector<32x1xf32> to vector<32x32xf32>
    %117 = arith.mulf %112, %116 : vector<32x32xf32>
    %118 = vector.broadcast %97 : vector<1x32xf32> to vector<32x32xf32>
    %119 = arith.mulf %117, %118 : vector<32x32xf32>
    %120 = vector.broadcast %99 : vector<1x32xf32> to vector<32x32xf32>
    %121 = arith.addf %119, %120 : vector<32x32xf32>
    %122 = arith.addf %0, %121 : vector<32x32xf32>
    %c1 = arith.constant 1 : index
    %c0_63 = arith.constant 0 : index
    %c0_64 = arith.constant 0 : index
    %123 = vector.load %arg5[%c1, %c0_63, %c0_64] : memref<2x32x160xf32, #tpu.memory_space<vmem>>, vector<1x32x160xf32>
    %124 = vector.shape_cast %123 : vector<1x32x160xf32> to vector<32x160xf32>
    %cst_65 = arith.constant dense<0.000000e+00> : vector<32x160xf32>
    %125 = tpu.matmul %122, %124, %cst_65 {dimension_numbers = #tpu.dot_dimension_numbers<[1], [0], [0], [1], [0, 0, 1, 1], [], []>} : vector<32x32xf32>, vector<32x160xf32>, vector<32x160xf32> -> vector<32x160xf32>
    %126 = vector.extract_strided_slice %125 {offsets = [0, 0], sizes = [32, 64], strides = [1, 1]} : vector<32x160xf32> to vector<32x64xf32>
    %127 = arith.mulf %126, %1 : vector<32x64xf32>
    %128 = vector.extract_strided_slice %125 {offsets = [0, 64], sizes = [32, 64], strides = [1, 1]} : vector<32x160xf32> to vector<32x64xf32>
    %129 = arith.mulf %128, %2 : vector<32x64xf32>
    %130 = arith.addf %127, %129 : vector<32x64xf32>
    %131 = vector.extract_strided_slice %125 {offsets = [0, 128], sizes = [32, 32], strides = [1, 1]} : vector<32x160xf32> to vector<32x32xf32>
    %cst_66 = arith.constant 0.000000e+00 : f32
    %132 = vector.broadcast %cst_66 : f32 to vector<32x64xf32>
    %133 = arith.cmpf ogt, %130, %132 : vector<32x64xf32>
    %cst_67 = arith.constant 1.000000e+00 : f32
    %134 = vector.broadcast %cst_67 : f32 to vector<32x64xf32>
    %135 = arith.addf %130, %134 : vector<32x64xf32>
    %cst_68 = arith.constant 0.000000e+00 : f32
    %136 = vector.broadcast %cst_68 : f32 to vector<32x64xf32>
    %137 = arith.minimumf %130, %136 : vector<32x64xf32>
    %138 = math.exp %137 : vector<32x64xf32>
    %139 = arith.select %133, %135, %138 : vector<32x64xi1>, vector<32x64xf32>
    %140 = vector.extract_strided_slice %139 {offsets = [0, 0], sizes = [32, 32], strides = [1, 1]} : vector<32x64xf32> to vector<32x32xf32>
    %141 = vector.extract_strided_slice %139 {offsets = [0, 32], sizes = [32, 32], strides = [1, 1]} : vector<32x64xf32> to vector<32x32xf32>
    %142 = vector.extract_strided_slice %140 {offsets = [0, 0], sizes = [16, 32], strides = [1, 1]} : vector<32x32xf32> to vector<16x32xf32>
    %143 = vector.extract_strided_slice %141 {offsets = [0, 0], sizes = [16, 32], strides = [1, 1]} : vector<32x32xf32> to vector<16x32xf32>
    %144 = vector.extract_strided_slice %131 {offsets = [0, 0], sizes = [16, 32], strides = [1, 1]} : vector<32x32xf32> to vector<16x32xf32>
    %cst_69 = arith.constant 6.250000e-02 : f32
    %145 = vector.broadcast %cst_69 : f32 to vector<16x32xf32>
    %146 = arith.mulf %144, %145 : vector<16x32xf32>
    %cst_70 = arith.constant dense<0.000000e+00> : vector<32x32xf32>
    %147 = tpu.matmul %143, %146, %cst_70 {dimension_numbers = #tpu.dot_dimension_numbers<[0], [0], [1], [1], [0, 1, 1, 1], [], []>} : vector<16x32xf32>, vector<16x32xf32>, vector<32x32xf32> -> vector<32x32xf32>
    %148 = arith.mulf %147, %3 : vector<32x32xf32>
    %cst_71 = arith.constant dense<0.000000e+00> : vector<16x32xf32>
    %149 = tpu.matmul %142, %148, %cst_71 {dimension_numbers = #tpu.dot_dimension_numbers<[1], [0], [0], [1], [0, 0, 1, 1], [], []>} : vector<16x32xf32>, vector<32x32xf32>, vector<16x32xf32> -> vector<16x32xf32>
    %cst_72 = arith.constant dense<0.000000e+00> : vector<32xf32>
    %150 = vector.multi_reduction <add>, %143, %cst_72 [0] : vector<16x32xf32> to vector<32xf32>
    %151 = vector.shape_cast %150 : vector<32xf32> to vector<1x32xf32>
    %152 = vector.broadcast %151 : vector<1x32xf32> to vector<16x32xf32>
    %153 = arith.mulf %142, %152 : vector<16x32xf32>
    %154 = vector.extract_strided_slice %140 {offsets = [16, 0], sizes = [16, 32], strides = [1, 1]} : vector<32x32xf32> to vector<16x32xf32>
    %155 = vector.extract_strided_slice %141 {offsets = [16, 0], sizes = [16, 32], strides = [1, 1]} : vector<32x32xf32> to vector<16x32xf32>
    %156 = vector.extract_strided_slice %131 {offsets = [16, 0], sizes = [16, 32], strides = [1, 1]} : vector<32x32xf32> to vector<16x32xf32>
    %cst_73 = arith.constant 6.250000e-02 : f32
    %157 = vector.broadcast %cst_73 : f32 to vector<16x32xf32>
    %158 = arith.mulf %156, %157 : vector<16x32xf32>
    %cst_74 = arith.constant dense<0.000000e+00> : vector<32x32xf32>
    %159 = tpu.matmul %155, %158, %cst_74 {dimension_numbers = #tpu.dot_dimension_numbers<[0], [0], [1], [1], [0, 1, 1, 1], [], []>} : vector<16x32xf32>, vector<16x32xf32>, vector<32x32xf32> -> vector<32x32xf32>
    %160 = arith.mulf %159, %3 : vector<32x32xf32>
    %cst_75 = arith.constant dense<0.000000e+00> : vector<16x32xf32>
    %161 = tpu.matmul %154, %160, %cst_75 {dimension_numbers = #tpu.dot_dimension_numbers<[1], [0], [0], [1], [0, 0, 1, 1], [], []>} : vector<16x32xf32>, vector<32x32xf32>, vector<16x32xf32> -> vector<16x32xf32>
    %cst_76 = arith.constant dense<0.000000e+00> : vector<32xf32>
    %162 = vector.multi_reduction <add>, %155, %cst_76 [0] : vector<16x32xf32> to vector<32xf32>
    %163 = vector.shape_cast %162 : vector<32xf32> to vector<1x32xf32>
    %164 = vector.broadcast %163 : vector<1x32xf32> to vector<16x32xf32>
    %165 = arith.mulf %154, %164 : vector<16x32xf32>
    %166 = tpu.concatenate %149, %161 in 0 : vector<16x32xf32>, vector<16x32xf32> -> vector<32x32xf32>
    %167 = tpu.concatenate %153, %165 in 0 : vector<16x32xf32>, vector<16x32xf32> -> vector<32x32xf32>
    %cst_77 = arith.constant dense<0.000000e+00> : vector<32x32xf32>
    %168 = tpu.matmul %167, %3, %cst_77 {dimension_numbers = #tpu.dot_dimension_numbers<[1], [0], [0], [1], [0, 0, 1, 1], [], []>} : vector<32x32xf32>, vector<32x32xf32>, vector<32x32xf32> -> vector<32x32xf32>
    %cst_78 = arith.constant 9.99999997E-7 : f32
    %169 = vector.broadcast %cst_78 : f32 to vector<32x32xf32>
    %170 = arith.addf %168, %169 : vector<32x32xf32>
    %cst_79 = arith.constant 1.600000e+01 : f32
    %171 = vector.broadcast %cst_79 : f32 to vector<32x32xf32>
    %172 = arith.divf %171, %170 : vector<32x32xf32>
    %173 = arith.mulf %166, %172 : vector<32x32xf32>
    %c1_80 = arith.constant 1 : index
    %c0_81 = arith.constant 0 : index
    %c0_82 = arith.constant 0 : index
    %174 = vector.load %arg6[%c1_80, %c0_81, %c0_82] : memref<2x32x32xf32, #tpu.memory_space<vmem>>, vector<1x32x32xf32>
    %175 = vector.shape_cast %174 : vector<1x32x32xf32> to vector<32x32xf32>
    %cst_83 = arith.constant dense<0.000000e+00> : vector<32x32xf32>
    %176 = tpu.matmul %173, %175, %cst_83 {dimension_numbers = #tpu.dot_dimension_numbers<[1], [0], [0], [1], [0, 0, 1, 1], [], []>} : vector<32x32xf32>, vector<32x32xf32>, vector<32x32xf32> -> vector<32x32xf32>
    %c1_84 = arith.constant 1 : index
    %c0_85 = arith.constant 0 : index
    %c0_86 = arith.constant 0 : index
    %177 = vector.load %arg10[%c1_84, %c0_85, %c0_86] : memref<2x1x32xf32, #tpu.memory_space<vmem>>, vector<1x1x32xf32>
    %178 = vector.shape_cast %177 : vector<1x1x32xf32> to vector<1x32xf32>
    %c1_87 = arith.constant 1 : index
    %c0_88 = arith.constant 0 : index
    %c0_89 = arith.constant 0 : index
    %179 = vector.load %arg11[%c1_87, %c0_88, %c0_89] : memref<2x1x32xf32, #tpu.memory_space<vmem>>, vector<1x1x32xf32>
    %180 = vector.shape_cast %179 : vector<1x1x32xf32> to vector<1x32xf32>
    %cst_90 = arith.constant dense<0.000000e+00> : vector<32xf32>
    %181 = vector.multi_reduction <add>, %176, %cst_90 [1] : vector<32x32xf32> to vector<32xf32>
    %182 = vector.shape_cast %181 : vector<32xf32> to vector<32x1xf32>
    %cst_91 = arith.constant 3.200000e+01 : f32
    %183 = vector.broadcast %cst_91 : f32 to vector<32x1xf32>
    %184 = arith.divf %182, %183 : vector<32x1xf32>
    %185 = arith.mulf %176, %176 : vector<32x32xf32>
    %cst_92 = arith.constant dense<0.000000e+00> : vector<32xf32>
    %186 = vector.multi_reduction <add>, %185, %cst_92 [1] : vector<32x32xf32> to vector<32xf32>
    %187 = vector.shape_cast %186 : vector<32xf32> to vector<32x1xf32>
    %cst_93 = arith.constant 3.200000e+01 : f32
    %188 = vector.broadcast %cst_93 : f32 to vector<32x1xf32>
    %189 = arith.divf %187, %188 : vector<32x1xf32>
    %190 = arith.mulf %184, %184 : vector<32x1xf32>
    %191 = arith.subf %189, %190 : vector<32x1xf32>
    %192 = vector.broadcast %184 : vector<32x1xf32> to vector<32x32xf32>
    %193 = arith.subf %176, %192 : vector<32x32xf32>
    %cst_94 = arith.constant 9.99999974E-6 : f32
    %194 = vector.broadcast %cst_94 : f32 to vector<32x1xf32>
    %195 = arith.addf %191, %194 : vector<32x1xf32>
    %196 = math.rsqrt %195 : vector<32x1xf32>
    %197 = vector.broadcast %196 : vector<32x1xf32> to vector<32x32xf32>
    %198 = arith.mulf %193, %197 : vector<32x32xf32>
    %199 = vector.broadcast %178 : vector<1x32xf32> to vector<32x32xf32>
    %200 = arith.mulf %198, %199 : vector<32x32xf32>
    %201 = vector.broadcast %180 : vector<1x32xf32> to vector<32x32xf32>
    %202 = arith.addf %200, %201 : vector<32x32xf32>
    %c1_95 = arith.constant 1 : index
    %c0_96 = arith.constant 0 : index
    %c0_97 = arith.constant 0 : index
    %203 = vector.load %arg7[%c1_95, %c0_96, %c0_97] : memref<2x32x64xf32, #tpu.memory_space<vmem>>, vector<1x32x64xf32>
    %204 = vector.shape_cast %203 : vector<1x32x64xf32> to vector<32x64xf32>
    %cst_98 = arith.constant dense<0.000000e+00> : vector<32x64xf32>
    %205 = tpu.matmul %122, %204, %cst_98 {dimension_numbers = #tpu.dot_dimension_numbers<[1], [0], [0], [1], [0, 0, 1, 1], [], []>} : vector<32x32xf32>, vector<32x64xf32>, vector<32x64xf32> -> vector<32x64xf32>
    %c1_99 = arith.constant 1 : index
    %c0_100 = arith.constant 0 : index
    %c0_101 = arith.constant 0 : index
    %206 = vector.load %arg8[%c1_99, %c0_100, %c0_101] : memref<2x32x64xf32, #tpu.memory_space<vmem>>, vector<1x32x64xf32>
    %207 = vector.shape_cast %206 : vector<1x32x64xf32> to vector<32x64xf32>
    %cst_102 = arith.constant dense<0.000000e+00> : vector<32x64xf32>
    %208 = tpu.matmul %202, %207, %cst_102 {dimension_numbers = #tpu.dot_dimension_numbers<[1], [0], [0], [1], [0, 0, 1, 1], [], []>} : vector<32x32xf32>, vector<32x64xf32>, vector<32x64xf32> -> vector<32x64xf32>
    %209 = arith.addf %205, %208 : vector<32x64xf32>
    %cst_103 = arith.constant 0.000000e+00 : f32
    %210 = vector.broadcast %cst_103 : f32 to vector<32x64xf32>
    %211 = arith.maximumf %209, %210 : vector<32x64xf32>
    %c1_104 = arith.constant 1 : index
    %c0_105 = arith.constant 0 : index
    %c0_106 = arith.constant 0 : index
    %212 = vector.load %arg9[%c1_104, %c0_105, %c0_106] : memref<2x64x32xf32, #tpu.memory_space<vmem>>, vector<1x64x32xf32>
    %213 = vector.shape_cast %212 : vector<1x64x32xf32> to vector<64x32xf32>
    %cst_107 = arith.constant dense<0.000000e+00> : vector<32x32xf32>
    %214 = tpu.matmul %211, %213, %cst_107 {dimension_numbers = #tpu.dot_dimension_numbers<[1], [0], [0], [1], [0, 0, 1, 1], [], []>} : vector<32x64xf32>, vector<64x32xf32>, vector<32x32xf32> -> vector<32x32xf32>
    %c1_108 = arith.constant 1 : index
    %c0_109 = arith.constant 0 : index
    %c0_110 = arith.constant 0 : index
    %215 = vector.load %arg12[%c1_108, %c0_109, %c0_110] : memref<2x1x32xf32, #tpu.memory_space<vmem>>, vector<1x1x32xf32>
    %216 = vector.shape_cast %215 : vector<1x1x32xf32> to vector<1x32xf32>
    %c1_111 = arith.constant 1 : index
    %c0_112 = arith.constant 0 : index
    %c0_113 = arith.constant 0 : index
    %217 = vector.load %arg13[%c1_111, %c0_112, %c0_113] : memref<2x1x32xf32, #tpu.memory_space<vmem>>, vector<1x1x32xf32>
    %218 = vector.shape_cast %217 : vector<1x1x32xf32> to vector<1x32xf32>
    %cst_114 = arith.constant dense<0.000000e+00> : vector<32xf32>
    %219 = vector.multi_reduction <add>, %214, %cst_114 [1] : vector<32x32xf32> to vector<32xf32>
    %220 = vector.shape_cast %219 : vector<32xf32> to vector<32x1xf32>
    %cst_115 = arith.constant 3.200000e+01 : f32
    %221 = vector.broadcast %cst_115 : f32 to vector<32x1xf32>
    %222 = arith.divf %220, %221 : vector<32x1xf32>
    %223 = arith.mulf %214, %214 : vector<32x32xf32>
    %cst_116 = arith.constant dense<0.000000e+00> : vector<32xf32>
    %224 = vector.multi_reduction <add>, %223, %cst_116 [1] : vector<32x32xf32> to vector<32xf32>
    %225 = vector.shape_cast %224 : vector<32xf32> to vector<32x1xf32>
    %cst_117 = arith.constant 3.200000e+01 : f32
    %226 = vector.broadcast %cst_117 : f32 to vector<32x1xf32>
    %227 = arith.divf %225, %226 : vector<32x1xf32>
    %228 = arith.mulf %222, %222 : vector<32x1xf32>
    %229 = arith.subf %227, %228 : vector<32x1xf32>
    %230 = vector.broadcast %222 : vector<32x1xf32> to vector<32x32xf32>
    %231 = arith.subf %214, %230 : vector<32x32xf32>
    %cst_118 = arith.constant 9.99999974E-6 : f32
    %232 = vector.broadcast %cst_118 : f32 to vector<32x1xf32>
    %233 = arith.addf %229, %232 : vector<32x1xf32>
    %234 = math.rsqrt %233 : vector<32x1xf32>
    %235 = vector.broadcast %234 : vector<32x1xf32> to vector<32x32xf32>
    %236 = arith.mulf %231, %235 : vector<32x32xf32>
    %237 = vector.broadcast %216 : vector<1x32xf32> to vector<32x32xf32>
    %238 = arith.mulf %236, %237 : vector<32x32xf32>
    %239 = vector.broadcast %218 : vector<1x32xf32> to vector<32x32xf32>
    %240 = arith.addf %238, %239 : vector<32x32xf32>
    %241 = arith.addf %122, %240 : vector<32x32xf32>
    %c0_119 = arith.constant 0 : index
    %c0_120 = arith.constant 0 : index
    %242 = vector.load %arg14[%c0_119, %c0_120] : memref<32x32xf32, #tpu.memory_space<vmem>>, vector<32x32xf32>
    tpu.vector_store %arg14[%c0_119, %c0_120], %241 {strides = array<i32>} : memref<32x32xf32, #tpu.memory_space<vmem>>, vector<32x32xf32>,
    return
  }
  func.func @transform_0(%arg0: i32) -> (i32, i32) {
    %c0_i32 = arith.constant 0 : i32
    %c0_i32_0 = arith.constant 0 : i32
    %c0_i32_1 = arith.constant 0 : i32
    return %c0_i32, %c0_i32_0 : i32, i32
  }
  func.func @transform_1(%arg0: i32) -> (i32, i32) {
    %c0_i32 = arith.constant 0 : i32
    %c0_i32_0 = arith.constant 0 : i32
    %c0_i32_1 = arith.constant 0 : i32
    return %c0_i32, %c0_i32_0 : i32, i32
  }
  func.func @transform_2(%arg0: i32) -> (i32, i32) {
    %c0_i32 = arith.constant 0 : i32
    %c0_i32_0 = arith.constant 0 : i32
    %c0_i32_1 = arith.constant 0 : i32
    return %c0_i32, %c0_i32_0 : i32, i32
  }
  func.func @transform_3(%arg0: i32) -> (i32, i32) {
    %c0_i32 = arith.constant 0 : i32
    %c0_i32_0 = arith.constant 0 : i32
    %c0_i32_1 = arith.constant 0 : i32
    return %c0_i32, %c0_i32_0 : i32, i32
  }
  func.func @transform_4(%arg0: i32) -> (i32, i32, i32) {
    %c0_i32 = arith.constant 0 : i32
    %c0_i32_0 = arith.constant 0 : i32
    %c0_i32_1 = arith.constant 0 : i32
    %c0_i32_2 = arith.constant 0 : i32
    return %c0_i32, %c0_i32_0, %c0_i32_1 : i32, i32, i32
  }
  func.func @transform_5(%arg0: i32) -> (i32, i32, i32) {
    %c0_i32 = arith.constant 0 : i32
    %c0_i32_0 = arith.constant 0 : i32
    %c0_i32_1 = arith.constant 0 : i32
    %c0_i32_2 = arith.constant 0 : i32
    return %c0_i32, %c0_i32_0, %c0_i32_1 : i32, i32, i32
  }
  func.func @transform_6(%arg0: i32) -> (i32, i32, i32) {
    %c0_i32 = arith.constant 0 : i32
    %c0_i32_0 = arith.constant 0 : i32
    %c0_i32_1 = arith.constant 0 : i32
    %c0_i32_2 = arith.constant 0 : i32
    return %c0_i32, %c0_i32_0, %c0_i32_1 : i32, i32, i32
  }
  func.func @transform_7(%arg0: i32) -> (i32, i32, i32) {
    %c0_i32 = arith.constant 0 : i32
    %c0_i32_0 = arith.constant 0 : i32
    %c0_i32_1 = arith.constant 0 : i32
    %c0_i32_2 = arith.constant 0 : i32
    return %c0_i32, %c0_i32_0, %c0_i32_1 : i32, i32, i32
  }
  func.func @transform_8(%arg0: i32) -> (i32, i32, i32) {
    %c0_i32 = arith.constant 0 : i32
    %c0_i32_0 = arith.constant 0 : i32
    %c0_i32_1 = arith.constant 0 : i32
    %c0_i32_2 = arith.constant 0 : i32
    return %c0_i32, %c0_i32_0, %c0_i32_1 : i32, i32, i32
  }
  func.func @transform_9(%arg0: i32) -> (i32, i32, i32) {
    %c0_i32 = arith.constant 0 : i32
    %c0_i32_0 = arith.constant 0 : i32
    %c0_i32_1 = arith.constant 0 : i32
    %c0_i32_2 = arith.constant 0 : i32
    return %c0_i32, %c0_i32_0, %c0_i32_1 : i32, i32, i32
  }
  func.func @transform_10(%arg0: i32) -> (i32, i32, i32) {
    %c0_i32 = arith.constant 0 : i32
    %c0_i32_0 = arith.constant 0 : i32
    %c0_i32_1 = arith.constant 0 : i32
    %c0_i32_2 = arith.constant 0 : i32
    return %c0_i32, %c0_i32_0, %c0_i32_1 : i32, i32, i32
  }
  func.func @transform_11(%arg0: i32) -> (i32, i32, i32) {
    %c0_i32 = arith.constant 0 : i32
    %c0_i32_0 = arith.constant 0 : i32
    %c0_i32_1 = arith.constant 0 : i32
    %c0_i32_2 = arith.constant 0 : i32
    return %c0_i32, %c0_i32_0, %c0_i32_1 : i32, i32, i32
  }
  func.func @transform_12(%arg0: i32) -> (i32, i32, i32) {
    %c0_i32 = arith.constant 0 : i32
    %c0_i32_0 = arith.constant 0 : i32
    %c0_i32_1 = arith.constant 0 : i32
    %c0_i32_2 = arith.constant 0 : i32
    return %c0_i32, %c0_i32_0, %c0_i32_1 : i32, i32, i32
  }
  func.func @transform_13(%arg0: i32) -> (i32, i32) {
    %c0_i32 = arith.constant 0 : i32
    %c0_i32_0 = arith.constant 0 : i32
    %c0_i32_1 = arith.constant 0 : i32
    return %c0_i32, %c0_i32_0 : i32, i32
  }
}

</mosaic_0001>

<llo_original>
// kernel: tpu_custom_call.1
$region0: #{tpu_custom_call.1}
  #allocation0 [shape = 'u32[]', space=smem, size = 0x4, offset = 0x4, fixed_abs, tag = 'smem constant byte address 0x4 - core index']
  #allocation1 [shape = 'u32[72,128]{1,0:T(1,128)}', space=vmem, size = 0x9000, scoped, tag = 'internal scratch']
  %s0 = inlined_call_operand.hbm [shape: f32[32,32], index: 0, kind: input, shape index: {}]
  %s1 = inlined_call_operand.hbm [shape: f32[32,64], index: 1, kind: input, shape index: {}]
  %s2 = inlined_call_operand.hbm [shape: f32[32,64], index: 2, kind: input, shape index: {}]
  %s3 = inlined_call_operand.hbm [shape: f32[32,32], index: 3, kind: input, shape index: {}]
  %s4 = inlined_call_operand.vmem [shape: f32[2,32,160], index: 4, kind: input, shape index: {}]
  %s5 = inlined_call_operand.vmem [shape: f32[2,32,32], index: 5, kind: input, shape index: {}]
  %s6 = inlined_call_operand.hbm [shape: f32[2,32,64], index: 6, kind: input, shape index: {}]
  %s7 = inlined_call_operand.hbm [shape: f32[2,32,64], index: 7, kind: input, shape index: {}]
  %s8 = inlined_call_operand.vmem [shape: f32[2,64,32], index: 8, kind: input, shape index: {}]
  %s9 = inlined_call_operand.vmem [shape: f32[2,1,32], index: 9, kind: input, shape index: {}]
  %s10 = inlined_call_operand.vmem [shape: f32[2,1,32], index: 10, kind: input, shape index: {}]
  %s11 = inlined_call_operand.vmem [shape: f32[2,1,32], index: 11, kind: input, shape index: {}]
  %s12 = inlined_call_operand.vmem [shape: f32[2,1,32], index: 12, kind: input, shape index: {}]
  %s13 = inlined_call_operand.hbm [shape: f32[32,32], index: 13, kind: output, shape index: {}]
  %s14 = sld [smem:[#allocation0]]
  $region86: #{tpu_custom_call.1} parent=0
    _
  %s16 = ssub.s32 1, %s14
  %s17 = scalar_select 0, %s16, %s14
  $region1: #{tpu_custom_call.1} parent=0
    #allocation2 [shape = 'u8[16384]{0}', space=vmem, size = 0x4000, scoped, tag = 'input window, operand 0, single buffered']
    #allocation3 [shape = 's32[1]{0}', space=sflag, size = 0x4, scoped, tag = 'scoped memory for tpu_custom_call.1']
    #allocation4 [shape = 's32[1]{0}', space=sflag, size = 0x4, scoped, tag = 'scoped memory for tpu_custom_call.1']
    #allocation5 [shape = 'u8[16384]{0}', space=vmem, size = 0x4000, scoped, tag = 'input window, operand 1, single buffered']
    #allocation6 [shape = 's32[1]{0}', space=sflag, size = 0x4, scoped, tag = 'scoped memory for tpu_custom_call.1']
    #allocation7 [shape = 'u8[16384]{0}', space=vmem, size = 0x4000, scoped, tag = 'input window, operand 2, single buffered']
    #allocation8 [shape = 'u8[16384]{0}', space=vmem, size = 0x4000, scoped, tag = 'input window, operand 3, single buffered']
    #allocation9 [shape = 's32[1]{0}', space=sflag, size = 0x4, scoped, tag = 'scoped memory for tpu_custom_call.1']
    #allocation10 [shape = 'u8[32768]{0}', space=vmem, size = 0x8000, scoped, tag = 'input window, operand 6, single buffered']
    #allocation11 [shape = 'u8[32768]{0}', space=vmem, size = 0x8000, scoped, tag = 'input window, operand 7, single buffered']
    #allocation12 [shape = 's32[1]{0}', space=sflag, size = 0x4, scoped, tag = 'scoped memory for tpu_custom_call.1']
    #allocation13 [shape = 'u8[16384]{0}', space=vmem, size = 0x4000, scoped, tag = 'output window, operand 0, single buffered']
    %18 = vsyncpa [#allocation3], 0
    %19 = vsyncpa [#allocation6], 0
    %20 = vsyncpa [#allocation9], 0
    %21 = vsyncpa [#allocation12], 0
    %22 = vsyncpa [#allocation4], 0
    // Predicated region
    $region2: #{tpu_custom_call.1} parent=1 // pred_check
      _
    $region3: #{tpu_custom_call.1} parent=1 // pred_check_branch
      %24 = sbr.rel (0) target = $region5
    $region4: #{tpu_custom_call.1} parent=1 // pred_region
      %26 = vsyncadd [#allocation3], 0
      %s27 = sshll.u32 %s0, 4
      %s28 = int_to_ptr.hbm [resolvable:$true] %s27
      %s29 = sshll.u32 [#allocation2], 4
      %s30 = int_to_ptr.vmem [resolvable:$true] %s29
      %35 = dma.hbm_to_vmem [thread:$0]  %s28, 512, %s30, [#allocation3], 128, 128, 8
    $region5: #{tpu_custom_call.1} parent=1 // pred_fallthru
      _
    // Predicated region
    $region6: #{tpu_custom_call.1} parent=1 // pred_check
      _
    $region7: #{tpu_custom_call.1} parent=1 // pred_check_branch
      %37 = sbr.rel (0) target = $region9
    $region8: #{tpu_custom_call.1} parent=1 // pred_region
      %39 = vsyncadd [#allocation6], 0
      %s40 = sshll.u32 %s1, 4
      %s41 = int_to_ptr.hbm [resolvable:$true] %s40
      %s42 = sshll.u32 [#allocation5], 4
      %s43 = int_to_ptr.vmem [resolvable:$true] %s42
      %48 = dma.hbm_to_vmem [thread:$0]  %s41, 512, %s43, [#allocation6], 128, 128, 8
    $region9: #{tpu_custom_call.1} parent=1 // pred_fallthru
      _
    // Predicated region
    $region10: #{tpu_custom_call.1} parent=1 // pred_check
      _
    $region11: #{tpu_custom_call.1} parent=1 // pred_check_branch
      %50 = sbr.rel (0) target = $region13
    $region12: #{tpu_custom_call.1} parent=1 // pred_region
      %52 = vsyncadd [#allocation6], 0
      %s53 = sshll.u32 %s2, 4
      %s54 = int_to_ptr.hbm [resolvable:$true] %s53
      %s55 = sshll.u32 [#allocation7], 4
      %s56 = int_to_ptr.vmem [resolvable:$true] %s55
      %61 = dma.hbm_to_vmem [thread:$0]  %s54, 512, %s56, [#allocation6], 128, 128, 8
    $region13: #{tpu_custom_call.1} parent=1 // pred_fallthru
      _
    // Predicated region
    $region14: #{tpu_custom_call.1} parent=1 // pred_check
      _
    $region15: #{tpu_custom_call.1} parent=1 // pred_check_branch
      %63 = sbr.rel (0) target = $region17
    $region16: #{tpu_custom_call.1} parent=1 // pred_region
      %65 = vsyncadd [#allocation9], 0
      %s66 = sshll.u32 %s3, 4
      %s67 = int_to_ptr.hbm [resolvable:$true] %s66
      %s68 = sshll.u32 [#allocation8], 4
      %s69 = int_to_ptr.vmem [resolvable:$true] %s68
      %74 = dma.hbm_to_vmem [thread:$0]  %s67, 512, %s69, [#allocation9], 128, 128, 8
    $region17: #{tpu_custom_call.1} parent=1 // pred_fallthru
      _
    // Predicated region
    $region18: #{tpu_custom_call.1} parent=1 // pred_check
      _
    $region19: #{tpu_custom_call.1} parent=1 // pred_check_branch
      %76 = sbr.rel (0) target = $region21
    $region20: #{tpu_custom_call.1} parent=1 // pred_region
      _
    $region21: #{tpu_custom_call.1} parent=1 // pred_fallthru
      _
    // Predicated region
    $region22: #{tpu_custom_call.1} parent=1 // pred_check
      _
    $region23: #{tpu_custom_call.1} parent=1 // pred_check_branch
      %78 = sbr.rel (0) target = $region25
    $region24: #{tpu_custom_call.1} parent=1 // pred_region
      _
    $region25: #{tpu_custom_call.1} parent=1 // pred_fallthru
      _
    // Predicated region
    $region26: #{tpu_custom_call.1} parent=1 // pred_check
      _
    $region27: #{tpu_custom_call.1} parent=1 // pred_check_branch
      %80 = sbr.rel (0) target = $region29
    $region28: #{tpu_custom_call.1} parent=1 // pred_region
      %82 = vsyncadd [#allocation9], 0
      %s83 = sshll.u32 %s6, 4
      %s84 = int_to_ptr.hbm [resolvable:$true] %s83
      %s85 = sshll.u32 [#allocation10], 4
      %s86 = int_to_ptr.vmem [resolvable:$true] %s85
      %91 = dma.hbm_to_vmem [thread:$0]  %s84, 1024, %s86, [#allocation9], 128, 128, 8
    $region29: #{tpu_custom_call.1} parent=1 // pred_fallthru
      _
    // Predicated region
    $region30: #{tpu_custom_call.1} parent=1 // pred_check
      _
    $region31: #{tpu_custom_call.1} parent=1 // pred_check_branch
      %93 = sbr.rel (0) target = $region33
    $region32: #{tpu_custom_call.1} parent=1 // pred_region
      %95 = vsyncadd [#allocation12], 0
      %s96 = sshll.u32 %s7, 4
      %s97 = int_to_ptr.hbm [resolvable:$true] %s96
      %s98 = sshll.u32 [#allocation11], 4
      %s99 = int_to_ptr.vmem [resolvable:$true] %s98
      %104 = dma.hbm_to_vmem [thread:$0]  %s97, 1024, %s99, [#allocation12], 128, 128, 8
    $region33: #{tpu_custom_call.1} parent=1 // pred_fallthru
      _
    // Predicated region
    $region34: #{tpu_custom_call.1} parent=1 // pred_check
      _
    $region35: #{tpu_custom_call.1} parent=1 // pred_check_branch
      %106 = sbr.rel (0) target = $region37
    $region36: #{tpu_custom_call.1} parent=1 // pred_region
      _
    $region37: #{tpu_custom_call.1} parent=1 // pred_fallthru
      _
    // Predicated region
    $region38: #{tpu_custom_call.1} parent=1 // pred_check
      _
    $region39: #{tpu_custom_call.1} parent=1 // pred_check_branch
      %108 = sbr.rel (0) target = $region41
    $region40: #{tpu_custom_call.1} parent=1 // pred_region
      _
    $region41: #{tpu_custom_call.1} parent=1 // pred_fallthru
      _
    // Predicated region
    $region42: #{tpu_custom_call.1} parent=1 // pred_check
      _
    $region43: #{tpu_custom_call.1} parent=1 // pred_check_branch
      %110 = sbr.rel (0) target = $region45
    $region44: #{tpu_custom_call.1} parent=1 // pred_region
      _
    $region45: #{tpu_custom_call.1} parent=1 // pred_fallthru
      _
    // Predicated region
    $region46: #{tpu_custom_call.1} parent=1 // pred_check
      _
    $region47: #{tpu_custom_call.1} parent=1 // pred_check_branch
      %112 = sbr.rel (0) target = $region49
    $region48: #{tpu_custom_call.1} parent=1 // pred_region
      _
    $region49: #{tpu_custom_call.1} parent=1 // pred_fallthru
      _
    // Predicated region
    $region50: #{tpu_custom_call.1} parent=1 // pred_check
      _
    $region51: #{tpu_custom_call.1} parent=1 // pred_check_branch
      %114 = sbr.rel (0) target = $region53
    $region52: #{tpu_custom_call.1} parent=1 // pred_region
      _
    $region53: #{tpu_custom_call.1} parent=1 // pred_fallthru
      _
    // Predicated region
    $region54: #{tpu_custom_call.1} parent=1 // pred_check
      _
    $region55: #{tpu_custom_call.1} parent=1 // pred_check_branch
      %116 = sbr.rel (0) target = $region57
    $region56: #{tpu_custom_call.1} parent=1 // pred_region
      %118 = dma.done [#allocation3], 512
    $region57: #{tpu_custom_call.1} parent=1 // pred_fallthru
      _
    // Predicated region
    $region58: #{tpu_custom_call.1} parent=1 // pred_check
      _
    $region59: #{tpu_custom_call.1} parent=1 // pred_check_branch
      %120 = sbr.rel (0) target = $region61
    $region60: #{tpu_custom_call.1} parent=1 // pred_region
      %122 = dma.done [#allocation6], 512
    $region61: #{tpu_custom_call.1} parent=1 // pred_fallthru
      _
    // Predicated region
    $region62: #{tpu_custom_call.1} parent=1 // pred_check
      _
    $region63: #{tpu_custom_call.1} parent=1 // pred_check_branch
      %124 = sbr.rel (0) target = $region65
    $region64: #{tpu_custom_call.1} parent=1 // pred_region
      %126 = dma.done [#allocation6], 512
    $region65: #{tpu_custom_call.1} parent=1 // pred_fallthru
      _
    // Predicated region
    $region66: #{tpu_custom_call.1} parent=1 // pred_check
      _
    $region67: #{tpu_custom_call.1} parent=1 // pred_check_branch
      %128 = sbr.rel (0) target = $region69
    $region68: #{tpu_custom_call.1} parent=1 // pred_region
      %130 = dma.done [#allocation9], 512
    $region69: #{tpu_custom_call.1} parent=1 // pred_fallthru
      _
    // Predicated region
    $region70: #{tpu_custom_call.1} parent=1 // pred_check
      _
    $region71: #{tpu_custom_call.1} parent=1 // pred_check_branch
      %132 = sbr.rel (0) target = $region73
    $region72: #{tpu_custom_call.1} parent=1 // pred_region
      %134 = dma.done [#allocation9], 1024
    $region73: #{tpu_custom_call.1} parent=1 // pred_fallthru
      _
    // Predicated region
    $region74: #{tpu_custom_call.1} parent=1 // pred_check
      _
    $region75: #{tpu_custom_call.1} parent=1 // pred_check_branch
      %136 = sbr.rel (0) target = $region77
    $region76: #{tpu_custom_call.1} parent=1 // pred_region
      %138 = dma.done [#allocation12], 1024
    $region77: #{tpu_custom_call.1} parent=1 // pred_fallthru
      _
    %v139 = vld [vmem:[#allocation2] sm:$0xff]
    %v140 = vld [vmem:[#allocation2 + $0x8] sm:$0xff]
    %v141 = vld [vmem:[#allocation2 + $0x10] sm:$0xff]
    %v142 = vld [vmem:[#allocation2 + $0x18] sm:$0xff]
    %v143 = vld [vmem:[#allocation5] sm:$0xff]
    %v144 = vld [vmem:[#allocation5 + $0x8] sm:$0xff]
    %v145 = vld [vmem:[#allocation5 + $0x10] sm:$0xff]
    %v146 = vld [vmem:[#allocation5 + $0x18] sm:$0xff]
    %v147 = vld [vmem:[#allocation7] sm:$0xff]
    %v148 = vld [vmem:[#allocation7 + $0x8] sm:$0xff]
    %v149 = vld [vmem:[#allocation7 + $0x10] sm:$0xff]
    %v150 = vld [vmem:[#allocation7 + $0x18] sm:$0xff]
    %v151 = vld [vmem:[#allocation8] sm:$0xff]
    %v152 = vld [vmem:[#allocation8 + $0x8] sm:$0xff]
    %v153 = vld [vmem:[#allocation8 + $0x10] sm:$0xff]
    %v154 = vld [vmem:[#allocation8 + $0x18] sm:$0xff]
    %v155 = vld [vmem:[%s4] sm:$0xff]
    %v156 = vld [vmem:[%s4 + $0x8] sm:$0xff]
    %v157 = vld [vmem:[%s4 + $0x10] sm:$0xff]
    %v158 = vld [vmem:[%s4 + $0x18] sm:$0xff]
    %v159 = vld [vmem:[%s4 + $0x20] sm:$0xff]
    %v160 = vld [vmem:[%s4 + $0x28] sm:$0xff]
    %v161 = vld [vmem:[%s4 + $0x30] sm:$0xff]
    %v162 = vld [vmem:[%s4 + $0x38] sm:$0xff]
    %vm163 = vcmask 261120
    %v165 = vsel %vm163, %v139, 0
    %v168 = vsel %vm163, %v140, 0
    %v171 = vsel %vm163, %v141, 0
    %v174 = vsel %vm163, %v142, 0
    %176 = vmatpush.msra.mxu0 0.0
    %177 = vmatpush.msra.mxu0 0.0
    %178 = vmatpush.msra.mxu0 0.0
    %179 = vmatpush.msra.mxu0 0.0
    %180 = vmatpush.msra.mxu0 0.0
    %181 = vmatpush.msra.mxu0 0.0
    %182 = vmatpush.msra.mxu0 0.0
    %183 = vmatpush.msra.mxu0 0.0
    %184 = vmatpush.msra.mxu0 0.0
    %185 = vmatpush.msra.mxu0 0.0
    %186 = vmatpush.msra.mxu0 0.0
    %187 = vmatpush.msra.mxu0 0.0
    %188 = vmatpush.msra.mxu0 %v161
    %189 = vmatpush.msra.mxu0 %v159
    %190 = vmatpush.msra.mxu0 %v157
    %191 = vmatpush.msra.mxu0 %v155
    %192 = vmatmul.f32.gmra.mxu0 %v165
    %v193 = vpop.f32.mrf.mxu0
    %v194 = vadd.f32 0.0, %v193
    %195 = vmatmul.f32.gmra.mxu0 %v168
    %v196 = vpop.f32.mrf.mxu0
    %v197 = vadd.f32 0.0, %v196
    %198 = vmatmul.f32.gmra.mxu0 %v171
    %v199 = vpop.f32.mrf.mxu0
    %v200 = vadd.f32 0.0, %v199
    %201 = vmatmul.f32.gmra.mxu0 %v174
    %v202 = vpop.f32.mrf.mxu0
    %v203 = vadd.f32 0.0, %v202
    %204 = vdwg.mxu0
    %205 = vmatpush.msra.mxu0 0.0
    %206 = vmatpush.msra.mxu0 0.0
    %207 = vmatpush.msra.mxu0 0.0
    %208 = vmatpush.msra.mxu0 0.0
    %209 = vmatpush.msra.mxu0 0.0
    %210 = vmatpush.msra.mxu0 0.0
    %211 = vmatpush.msra.mxu0 0.0
    %212 = vmatpush.msra.mxu0 0.0
    %213 = vmatpush.msra.mxu0 0.0
    %214 = vmatpush.msra.mxu0 0.0
    %215 = vmatpush.msra.mxu0 0.0
    %216 = vmatpush.msra.mxu0 0.0
    %217 = vmatpush.msra.mxu0 %v162
    %218 = vmatpush.msra.mxu0 %v160
    %219 = vmatpush.msra.mxu0 %v158
    %220 = vmatpush.msra.mxu0 %v156
    %221 = vmatmul.f32.gmra.mxu0 %v165
    %v222 = vpop.f32.mrf.mxu0
    %v223 = vadd.f32 0.0, %v222
    %224 = vmatmul.f32.gmra.mxu0 %v168
    %v225 = vpop.f32.mrf.mxu0
    %v226 = vadd.f32 0.0, %v225
    %227 = vmatmul.f32.gmra.mxu0 %v171
    %v228 = vpop.f32.mrf.mxu0
    %v229 = vadd.f32 0.0, %v228
    %230 = vmatmul.f32.gmra.mxu0 %v174
    %v231 = vpop.f32.mrf.mxu0
    %v232 = vadd.f32 0.0, %v231
    %233 = vdwg.mxu0
    %v234 = vmul.f32 %v194, %v143
    %v235 = vmul.f32 %v197, %v144
    %v236 = vmul.f32 %v200, %v145
    %v237 = vmul.f32 %v203, %v146
    %242 = vrot.lane.b32.xlu0 %v147, 64
    %v243 = vpop.permute.xlu0 %242
    %244 = vrot.lane.b32.xlu0 %v148, 64
    %v245 = vpop.permute.xlu0 %244
    %246 = vrot.lane.b32.xlu0 %v149, 64
    %v247 = vpop.permute.xlu0 %246
    %248 = vrot.lane.b32.xlu0 %v150, 64
    %v249 = vpop.permute.xlu0 %248
    %v254 = vmul.f32 %v194, %v243
    %v255 = vmul.f32 %v197, %v245
    %v256 = vmul.f32 %v200, %v247
    %v257 = vmul.f32 %v203, %v249
    %262 = vrot.lane.b32.xlu0 %v254, 64
    %v263 = vpop.permute.xlu0 %262
    %264 = vrot.lane.b32.xlu0 %v255, 64
    %v265 = vpop.permute.xlu0 %264
    %266 = vrot.lane.b32.xlu0 %v256, 64
    %v267 = vpop.permute.xlu0 %266
    %268 = vrot.lane.b32.xlu0 %v257, 64
    %v269 = vpop.permute.xlu0 %268
    %v274 = vadd.f32 %v234, %v263
    %v275 = vadd.f32 %v235, %v265
    %v276 = vadd.f32 %v236, %v267
    %v277 = vadd.f32 %v237, %v269
    %vm278 = vcmp.gt.f32.partialorder %v274, 0.0
    %vm279 = vcmp.gt.f32.partialorder %v275, 0.0
    %vm280 = vcmp.gt.f32.partialorder %v276, 0.0
    %vm281 = vcmp.gt.f32.partialorder %v277, 0.0
    %v282 = vadd.f32 %v274, 1.0
    %v283 = vadd.f32 %v275, 1.0
    %v284 = vadd.f32 %v276, 1.0
    %v285 = vadd.f32 %v277, 1.0
    %v286 = vmin.f32 %v274, 0.0
    %v287 = vmin.f32 %v275, 0.0
    %v288 = vmin.f32 %v276, 0.0
    %v289 = vmin.f32 %v277, 0.0
    %v290 = vmul.f32 %v286, 1.442695
    %v291 = vpow.pop %v290
    %v292 = vmul.f32 %v287, 1.442695
    %v293 = vpow.pop %v292
    %v294 = vmul.f32 %v288, 1.442695
    %v295 = vpow.pop %v294
    %v296 = vmul.f32 %v289, 1.442695
    %v297 = vpow.pop %v296
    %v298 = vsel %vm278, %v282, %v291
    %v299 = vsel %vm279, %v283, %v293
    %v300 = vsel %vm280, %v284, %v295
    %v301 = vsel %vm281, %v285, %v297
    %v302 = vmul.f32 %v223, 0.0625
    %v303 = vmul.f32 %v226, 0.0625
    %306 = vrot.lane.b32.xlu0 %v298, 96
    %v307 = vpop.permute.xlu0 %306
    %308 = vrot.lane.b32.xlu0 %v299, 96
    %v309 = vpop.permute.xlu0 %308
    %312 = vxpose.xlu0.b32.start [1/16] %v307, 128
    %313 = vxpose.xlu0.b32.cont [2/16] %v309, 128
    %314 = vxpose.xlu0.b32.cont [3/16] 0.0, 128
    %315 = vxpose.xlu0.b32.cont [4/16] 0.0, 128
    %316 = vxpose.xlu0.b32.cont [5/16] 0.0, 128
    %317 = vxpose.xlu0.b32.cont [6/16] 0.0, 128
    %318 = vxpose.xlu0.b32.cont [7/16] 0.0, 128
    %319 = vxpose.xlu0.b32.cont [8/16] 0.0, 128
    %320 = vxpose.xlu0.b32.cont [9/16] 0.0, 128
    %321 = vxpose.xlu0.b32.cont [10/16] 0.0, 128
    %322 = vxpose.xlu0.b32.cont [11/16] 0.0, 128
    %323 = vxpose.xlu0.b32.cont [12/16] 0.0, 128
    %324 = vxpose.xlu0.b32.cont [13/16] 0.0, 128
    %325 = vxpose.xlu0.b32.cont [14/16] 0.0, 128
    %326 = vxpose.xlu0.b32.cont [15/16] 0.0, 128
    %327 = vxpose.xlu0.b32.end [16/16] 0.0, 128
    %v328 = vpop.trf.xlu0
    %v329 = vpop.trf.xlu0
    %v330 = vpop.trf.xlu0
    %v331 = vpop.trf.xlu0
    %v332 = vpop.trf.xlu0
    %v333 = vpop.trf.xlu0
    %v334 = vpop.trf.xlu0
    %v335 = vpop.trf.xlu0
    %v336 = vpop.trf.xlu0
    %v337 = vpop.trf.xlu0
    %v338 = vpop.trf.xlu0
    %v339 = vpop.trf.xlu0
    %v340 = vpop.trf.xlu0
    %v341 = vpop.trf.xlu0
    %v342 = vpop.trf.xlu0
    %v343 = vpop.trf.xlu0
    %vm344 = vcmask 130048
    %v346 = vsel %vm344, %v328, 0
    %v349 = vsel %vm344, %v329, 0
    %v352 = vsel %vm344, %v330, 0
    %v355 = vsel %vm344, %v331, 0
    %357 = vmatpush.msra.mxu0 0.0
    %358 = vmatpush.msra.mxu0 0.0
    %359 = vmatpush.msra.mxu0 0.0
    %360 = vmatpush.msra.mxu0 0.0
    %361 = vmatpush.msra.mxu0 0.0
    %362 = vmatpush.msra.mxu0 0.0
    %363 = vmatpush.msra.mxu0 0.0
    %364 = vmatpush.msra.mxu0 0.0
    %365 = vmatpush.msra.mxu0 0.0
    %366 = vmatpush.msra.mxu0 0.0
    %367 = vmatpush.msra.mxu0 0.0
    %368 = vmatpush.msra.mxu0 0.0
    %369 = vmatpush.msra.mxu0 0.0
    %370 = vmatpush.msra.mxu0 0.0
    %371 = vmatpush.msra.mxu0 %v303
    %372 = vmatpush.msra.mxu0 %v302
    %373 = vmatmul.f32.gmra.mxu0 %v346
    %v374 = vpop.f32.mrf.mxu0
    %v375 = vadd.f32 0.0, %v374
    %376 = vmatmul.f32.gmra.mxu0 %v349
    %v377 = vpop.f32.mrf.mxu0
    %v378 = vadd.f32 0.0, %v377
    %379 = vmatmul.f32.gmra.mxu0 %v352
    %v380 = vpop.f32.mrf.mxu0
    %v381 = vadd.f32 0.0, %v380
    %382 = vmatmul.f32.gmra.mxu0 %v355
    %v383 = vpop.f32.mrf.mxu0
    %v384 = vadd.f32 0.0, %v383
    %385 = vdwg.mxu0
    %v386 = vmul.f32 %v375, %v151
    %v387 = vmul.f32 %v378, %v152
    %v388 = vmul.f32 %v381, %v153
    %v389 = vmul.f32 %v384, %v154
    %v390 = vsel %vm163, %v298, 0
    %v392 = vsel %vm163, %v299, 0
    %394 = vmatpush.msra.mxu0 0.0
    %395 = vmatpush.msra.mxu0 0.0
    %396 = vmatpush.msra.mxu0 0.0
    %397 = vmatpush.msra.mxu0 0.0
    %398 = vmatpush.msra.mxu0 0.0
    %399 = vmatpush.msra.mxu0 0.0
    %400 = vmatpush.msra.mxu0 0.0
    %401 = vmatpush.msra.mxu0 0.0
    %402 = vmatpush.msra.mxu0 0.0
    %403 = vmatpush.msra.mxu0 0.0
    %404 = vmatpush.msra.mxu0 0.0
    %405 = vmatpush.msra.mxu0 0.0
    %406 = vmatpush.msra.mxu0 %v389
    %407 = vmatpush.msra.mxu0 %v388
    %408 = vmatpush.msra.mxu0 %v387
    %409 = vmatpush.msra.mxu0 %v386
    %410 = vmatmul.f32.gmra.mxu0 %v390
    %v411 = vpop.f32.mrf.mxu0
    %v412 = vadd.f32 0.0, %v411
    %413 = vmatmul.f32.gmra.mxu0 %v392
    %v414 = vpop.f32.mrf.mxu0
    %v415 = vadd.f32 0.0, %v414
    %416 = vdwg.mxu0
    %vm417 = vcmask 523520
    %v418 = vsel %vm417, %v298, 0.0
    %v419 = vsel %vm417, %v299, 0.0
    %v420 = vadd.f32 %v418, %v419
    %v421 = vrot.slane %v420, 4
    %v422 = vadd.f32 %v420, %v421
    %v423 = vrot.slane %v422, 2
    %v424 = vadd.f32 %v422, %v423
    %v425 = vrot.slane %v424, 1
    %v426 = vadd.f32 %v424, %v425
    %428 = vrot.lane.b32.xlu0 %v426, 96
    %v429 = vpop.permute.xlu0 %428
    %v431 = vmul.f32 %v298, %v429
    %v432 = vmul.f32 %v299, %v429
    %v433 = vmul.f32 %v229, 0.0625
    %v434 = vmul.f32 %v232, 0.0625
    %437 = vrot.lane.b32.xlu0 %v300, 96
    %v438 = vpop.permute.xlu0 %437
    %439 = vrot.lane.b32.xlu0 %v301, 96
    %v440 = vpop.permute.xlu0 %439
    %443 = vxpose.xlu0.b32.start [1/16] %v438, 128
    %444 = vxpose.xlu0.b32.cont [2/16] %v440, 128
    %445 = vxpose.xlu0.b32.cont [3/16] 0.0, 128
    %446 = vxpose.xlu0.b32.cont [4/16] 0.0, 128
    %447 = vxpose.xlu0.b32.cont [5/16] 0.0, 128
    %448 = vxpose.xlu0.b32.cont [6/16] 0.0, 128
    %449 = vxpose.xlu0.b32.cont [7/16] 0.0, 128
    %450 = vxpose.xlu0.b32.cont [8/16] 0.0, 128
    %451 = vxpose.xlu0.b32.cont [9/16] 0.0, 128
    %452 = vxpose.xlu0.b32.cont [10/16] 0.0, 128
    %453 = vxpose.xlu0.b32.cont [11/16] 0.0, 128
    %454 = vxpose.xlu0.b32.cont [12/16] 0.0, 128
    %455 = vxpose.xlu0.b32.cont [13/16] 0.0, 128
    %456 = vxpose.xlu0.b32.cont [14/16] 0.0, 128
    %457 = vxpose.xlu0.b32.cont [15/16] 0.0, 128
    %458 = vxpose.xlu0.b32.end [16/16] 0.0, 128
    %v459 = vpop.trf.xlu0
    %v460 = vpop.trf.xlu0
    %v461 = vpop.trf.xlu0
    %v462 = vpop.trf.xlu0
    %v463 = vpop.trf.xlu0
    %v464 = vpop.trf.xlu0
    %v465 = vpop.trf.xlu0
    %v466 = vpop.trf.xlu0
    %v467 = vpop.trf.xlu0
    %v468 = vpop.trf.xlu0
    %v469 = vpop.trf.xlu0
    %v470 = vpop.trf.xlu0
    %v471 = vpop.trf.xlu0
    %v472 = vpop.trf.xlu0
    %v473 = vpop.trf.xlu0
    %v474 = vpop.trf.xlu0
    %v476 = vsel %vm344, %v459, 0
    %v479 = vsel %vm344, %v460, 0
    %v482 = vsel %vm344, %v461, 0
    %v485 = vsel %vm344, %v462, 0
    %487 = vmatpush.msra.mxu0 0.0
    %488 = vmatpush.msra.mxu0 0.0
    %489 = vmatpush.msra.mxu0 0.0
    %490 = vmatpush.msra.mxu0 0.0
    %491 = vmatpush.msra.mxu0 0.0
    %492 = vmatpush.msra.mxu0 0.0
    %493 = vmatpush.msra.mxu0 0.0
    %494 = vmatpush.msra.mxu0 0.0
    %495 = vmatpush.msra.mxu0 0.0
    %496 = vmatpush.msra.mxu0 0.0
    %497 = vmatpush.msra.mxu0 0.0
    %498 = vmatpush.msra.mxu0 0.0
    %499 = vmatpush.msra.mxu0 0.0
    %500 = vmatpush.msra.mxu0 0.0
    %501 = vmatpush.msra.mxu0 %v434
    %502 = vmatpush.msra.mxu0 %v433
    %503 = vmatmul.f32.gmra.mxu0 %v476
    %v504 = vpop.f32.mrf.mxu0
    %v505 = vadd.f32 0.0, %v504
    %506 = vmatmul.f32.gmra.mxu0 %v479
    %v507 = vpop.f32.mrf.mxu0
    %v508 = vadd.f32 0.0, %v507
    %509 = vmatmul.f32.gmra.mxu0 %v482
    %v510 = vpop.f32.mrf.mxu0
    %v511 = vadd.f32 0.0, %v510
    %512 = vmatmul.f32.gmra.mxu0 %v485
    %v513 = vpop.f32.mrf.mxu0
    %v514 = vadd.f32 0.0, %v513
    %515 = vdwg.mxu0
    %v516 = vmul.f32 %v505, %v151
    %v517 = vmul.f32 %v508, %v152
    %v518 = vmul.f32 %v511, %v153
    %v519 = vmul.f32 %v514, %v154
    %v520 = vsel %vm163, %v300, 0
    %v522 = vsel %vm163, %v301, 0
    %524 = vmatpush.msra.mxu0 0.0
    %525 = vmatpush.msra.mxu0 0.0
    %526 = vmatpush.msra.mxu0 0.0
    %527 = vmatpush.msra.mxu0 0.0
    %528 = vmatpush.msra.mxu0 0.0
    %529 = vmatpush.msra.mxu0 0.0
    %530 = vmatpush.msra.mxu0 0.0
    %531 = vmatpush.msra.mxu0 0.0
    %532 = vmatpush.msra.mxu0 0.0
    %533 = vmatpush.msra.mxu0 0.0
    %534 = vmatpush.msra.mxu0 0.0
    %535 = vmatpush.msra.mxu0 0.0
    %536 = vmatpush.msra.mxu0 %v519
    %537 = vmatpush.msra.mxu0 %v518
    %538 = vmatpush.msra.mxu0 %v517
    %539 = vmatpush.msra.mxu0 %v516
    %540 = vmatmul.f32.gmra.mxu0 %v520
    %v541 = vpop.f32.mrf.mxu0
    %v542 = vadd.f32 0.0, %v541
    %543 = vmatmul.f32.gmra.mxu0 %v522
    %v544 = vpop.f32.mrf.mxu0
    %v545 = vadd.f32 0.0, %v544
    %546 = vdwg.mxu0
    %v547 = vsel %vm417, %v300, 0.0
    %v548 = vsel %vm417, %v301, 0.0
    %v549 = vadd.f32 %v547, %v548
    %v550 = vrot.slane %v549, 4
    %v551 = vadd.f32 %v549, %v550
    %v552 = vrot.slane %v551, 2
    %v553 = vadd.f32 %v551, %v552
    %v554 = vrot.slane %v553, 1
    %v555 = vadd.f32 %v553, %v554
    %557 = vrot.lane.b32.xlu0 %v555, 96
    %v558 = vpop.permute.xlu0 %557
    %v560 = vmul.f32 %v300, %v558
    %v561 = vmul.f32 %v301, %v558
    %v563 = vsel %vm163, %v431, 0
    %v566 = vsel %vm163, %v432, 0
    %v569 = vsel %vm163, %v560, 0
    %v572 = vsel %vm163, %v561, 0
    %574 = vmatpush.msra.mxu0 0.0
    %575 = vmatpush.msra.mxu0 0.0
    %576 = vmatpush.msra.mxu0 0.0
    %577 = vmatpush.msra.mxu0 0.0
    %578 = vmatpush.msra.mxu0 0.0
    %579 = vmatpush.msra.mxu0 0.0
    %580 = vmatpush.msra.mxu0 0.0
    %581 = vmatpush.msra.mxu0 0.0
    %582 = vmatpush.msra.mxu0 0.0
    %583 = vmatpush.msra.mxu0 0.0
    %584 = vmatpush.msra.mxu0 0.0
    %585 = vmatpush.msra.mxu0 0.0
    %586 = vmatpush.msra.mxu0 %v154
    %587 = vmatpush.msra.mxu0 %v153
    %588 = vmatpush.msra.mxu0 %v152
    %589 = vmatpush.msra.mxu0 %v151
    %590 = vmatmul.f32.gmra.mxu0 %v563
    %v591 = vpop.f32.mrf.mxu0
    %v592 = vadd.f32 1e-06, %v591
    %593 = vmatmul.f32.gmra.mxu0 %v566
    %v594 = vpop.f32.mrf.mxu0
    %v595 = vadd.f32 1e-06, %v594
    %596 = vmatmul.f32.gmra.mxu0 %v569
    %v597 = vpop.f32.mrf.mxu0
    %v598 = vadd.f32 1e-06, %v597
    %599 = vmatmul.f32.gmra.mxu0 %v572
    %v600 = vpop.f32.mrf.mxu0
    %v601 = vadd.f32 1e-06, %v600
    %602 = vdwg.mxu0
    %v603 = vrcp.pop %v592
    %v604 = vmul.f32 %v592, %v603
    %v605 = vsub.f32 1.0, %v604
    %v606 = vmul.f32 %v603, %v605
    %v607 = vadd.f32 %v603, %v606
    %vm608 = vweird.f32 %v592
    %vm609 = vweird.f32 %v603
    %vm610 = vmor %vm608, %vm609
    %v611 = vsel %vm610, %v603, %v607
    %v612 = vand.u32 2147483647, %v592
    %vm613 = vcmp.eq.f32.partialorder %v612, 8.507059e+37
    %v614 = vand.u32 %v592, 2147483648
    %v615 = vor.u32 1.1754944e-38, %v614
    %v616 = vsel %vm613, %v615, %v611
    %v617 = vmul.f32 16.0, %v616
    %v618 = vrcp.pop %v595
    %v619 = vmul.f32 %v595, %v618
    %v620 = vsub.f32 1.0, %v619
    %v621 = vmul.f32 %v618, %v620
    %v622 = vadd.f32 %v618, %v621
    %vm623 = vweird.f32 %v595
    %vm624 = vweird.f32 %v618
    %vm625 = vmor %vm623, %vm624
    %v626 = vsel %vm625, %v618, %v622
    %v627 = vand.u32 2147483647, %v595
    %vm628 = vcmp.eq.f32.partialorder %v627, 8.507059e+37
    %v629 = vand.u32 %v595, 2147483648
    %v630 = vor.u32 1.1754944e-38, %v629
    %v631 = vsel %vm628, %v630, %v626
    %v632 = vmul.f32 16.0, %v631
    %v633 = vrcp.pop %v598
    %v634 = vmul.f32 %v598, %v633
    %v635 = vsub.f32 1.0, %v634
    %v636 = vmul.f32 %v633, %v635
    %v637 = vadd.f32 %v633, %v636
    %vm638 = vweird.f32 %v598
    %vm639 = vweird.f32 %v633
    %vm640 = vmor %vm638, %vm639
    %v641 = vsel %vm640, %v633, %v637
    %v642 = vand.u32 2147483647, %v598
    %vm643 = vcmp.eq.f32.partialorder %v642, 8.507059e+37
    %v644 = vand.u32 %v598, 2147483648
    %v645 = vor.u32 1.1754944e-38, %v644
    %v646 = vsel %vm643, %v645, %v641
    %v647 = vmul.f32 16.0, %v646
    %v648 = vrcp.pop %v601
    %v649 = vmul.f32 %v601, %v648
    %v650 = vsub.f32 1.0, %v649
    %v651 = vmul.f32 %v648, %v650
    %v652 = vadd.f32 %v648, %v651
    %vm653 = vweird.f32 %v601
    %vm654 = vweird.f32 %v648
    %vm655 = vmor %vm653, %vm654
    %v656 = vsel %vm655, %v648, %v652
    %v657 = vand.u32 2147483647, %v601
    %vm658 = vcmp.eq.f32.partialorder %v657, 8.507059e+37
    %v659 = vand.u32 %v601, 2147483648
    %v660 = vor.u32 1.1754944e-38, %v659
    %v661 = vsel %vm658, %v660, %v656
    %v662 = vmul.f32 16.0, %v661
    %v663 = vmul.f32 %v412, %v617
    %v664 = vmul.f32 %v415, %v632
    %v665 = vmul.f32 %v542, %v647
    %v666 = vmul.f32 %v545, %v662
    %v667 = vld [vmem:[%s5] sm:$0xff]
    %v668 = vld [vmem:[%s5 + $0x8] sm:$0xff]
    %v669 = vld [vmem:[%s5 + $0x10] sm:$0xff]
    %v670 = vld [vmem:[%s5 + $0x18] sm:$0xff]
    %v672 = vsel %vm163, %v663, 0
    %v675 = vsel %vm163, %v664, 0
    %v678 = vsel %vm163, %v665, 0
    %v681 = vsel %vm163, %v666, 0
    %683 = vmatpush.msra.mxu0 0.0
    %684 = vmatpush.msra.mxu0 0.0
    %685 = vmatpush.msra.mxu0 0.0
    %686 = vmatpush.msra.mxu0 0.0
    %687 = vmatpush.msra.mxu0 0.0
    %688 = vmatpush.msra.mxu0 0.0
    %689 = vmatpush.msra.mxu0 0.0
    %690 = vmatpush.msra.mxu0 0.0
    %691 = vmatpush.msra.mxu0 0.0
    %692 = vmatpush.msra.mxu0 0.0
    %693 = vmatpush.msra.mxu0 0.0
    %694 = vmatpush.msra.mxu0 0.0
    %695 = vmatpush.msra.mxu0 %v670
    %696 = vmatpush.msra.mxu0 %v669
    %697 = vmatpush.msra.mxu0 %v668
    %698 = vmatpush.msra.mxu0 %v667
    %699 = vmatmul.f32.gmra.mxu0 %v672
    %v700 = vpop.f32.mrf.mxu0
    %v701 = vadd.f32 0.0, %v700
    %702 = vmatmul.f32.gmra.mxu0 %v675
    %v703 = vpop.f32.mrf.mxu0
    %v704 = vadd.f32 0.0, %v703
    %705 = vmatmul.f32.gmra.mxu0 %v678
    %v706 = vpop.f32.mrf.mxu0
    %v707 = vadd.f32 0.0, %v706
    %708 = vmatmul.f32.gmra.mxu0 %v681
    %v709 = vpop.f32.mrf.mxu0
    %v710 = vadd.f32 0.0, %v709
    %711 = vdwg.mxu0
    %v712 = vld [vmem:[%s9] sm:$0x1]
    %v713 = vld [vmem:[%s10] sm:$0x1]
    %v714 = vsel %vm163, %v701, 0.0
    %715 = vadd.xlane.f32.xlu0 %v714
    %v716 = vpop.xlane.xlu0 %715
    %v717 = vsel %vm163, %v704, 0.0
    %718 = vadd.xlane.f32.xlu0 %v717
    %v719 = vpop.xlane.xlu0 %718
    %v720 = vsel %vm163, %v707, 0.0
    %721 = vadd.xlane.f32.xlu0 %v720
    %v722 = vpop.xlane.xlu0 %721
    %v723 = vsel %vm163, %v710, 0.0
    %724 = vadd.xlane.f32.xlu0 %v723
    %v725 = vpop.xlane.xlu0 %724
    %v726 = vrcp.pop 32.0
    %v727 = vmul.f32 32.0, %v726
    %v728 = vsub.f32 1.0, %v727
    %v729 = vmul.f32 %v726, %v728
    %v730 = vadd.f32 %v726, %v729
    %vm731 = vweird.f32 %v726
    %v732 = vsel %vm731, %v726, %v730
    %v733 = vmul.f32 %v716, %v732
    %v734 = vmul.f32 %v719, %v732
    %v735 = vmul.f32 %v722, %v732
    %v736 = vmul.f32 %v725, %v732
    %v737 = vmul.f32 %v701, %v701
    %v738 = vmul.f32 %v704, %v704
    %v739 = vmul.f32 %v707, %v707
    %v740 = vmul.f32 %v710, %v710
    %v741 = vsel %vm163, %v737, 0.0
    %742 = vadd.xlane.f32.xlu0 %v741
    %v743 = vpop.xlane.xlu0 %742
    %v744 = vsel %vm163, %v738, 0.0
    %745 = vadd.xlane.f32.xlu0 %v744
    %v746 = vpop.xlane.xlu0 %745
    %v747 = vsel %vm163, %v739, 0.0
    %748 = vadd.xlane.f32.xlu0 %v747
    %v749 = vpop.xlane.xlu0 %748
    %v750 = vsel %vm163, %v740, 0.0
    %751 = vadd.xlane.f32.xlu0 %v750
    %v752 = vpop.xlane.xlu0 %751
    %v753 = vmul.f32 %v743, %v732
    %v754 = vmul.f32 %v746, %v732
    %v755 = vmul.f32 %v749, %v732
    %v756 = vmul.f32 %v752, %v732
    %v757 = vmul.f32 %v733, %v733
    %v758 = vmul.f32 %v734, %v734
    %v759 = vmul.f32 %v735, %v735
    %v760 = vmul.f32 %v736, %v736
    %v761 = vsub.f32 %v753, %v757
    %v762 = vsub.f32 %v754, %v758
    %v763 = vsub.f32 %v755, %v759
    %v764 = vsub.f32 %v756, %v760
    %v765 = vsub.f32 %v701, %v733
    %v766 = vsub.f32 %v704, %v734
    %v767 = vsub.f32 %v707, %v735
    %v768 = vsub.f32 %v710, %v736
    %v769 = vadd.f32 %v761, 1e-05
    %v770 = vadd.f32 %v762, 1e-05
    %v771 = vadd.f32 %v763, 1e-05
    %v772 = vadd.f32 %v764, 1e-05
    %v773 = vrsqrt.pop %v769
    %v774 = vmul.f32 %v773, %v769
    %v775 = vmul.f32 %v774, %v773
    %v776 = vmul.f32 0.5, %v775
    %v777 = vsub.f32 1.5, %v776
    %v778 = vmul.f32 %v773, %v777
    %vm779 = vweird.f32 %v769
    %vm780 = vweird.f32 %v773
    %vm781 = vmor %vm779, %vm780
    %v782 = vsel %vm781, %v773, %v778
    %v783 = vrsqrt.pop %v770
    %v784 = vmul.f32 %v783, %v770
    %v785 = vmul.f32 %v784, %v783
    %v786 = vmul.f32 0.5, %v785
    %v787 = vsub.f32 1.5, %v786
    %v788 = vmul.f32 %v783, %v787
    %vm789 = vweird.f32 %v770
    %vm790 = vweird.f32 %v783
    %vm791 = vmor %vm789, %vm790
    %v792 = vsel %vm791, %v783, %v788
    %v793 = vrsqrt.pop %v771
    %v794 = vmul.f32 %v793, %v771
    %v795 = vmul.f32 %v794, %v793
    %v796 = vmul.f32 0.5, %v795
    %v797 = vsub.f32 1.5, %v796
    %v798 = vmul.f32 %v793, %v797
    %vm799 = vweird.f32 %v771
    %vm800 = vweird.f32 %v793
    %vm801 = vmor %vm799, %vm800
    %v802 = vsel %vm801, %v793, %v798
    %v803 = vrsqrt.pop %v772
    %v804 = vmul.f32 %v803, %v772
    %v805 = vmul.f32 %v804, %v803
    %v806 = vmul.f32 0.5, %v805
    %v807 = vsub.f32 1.5, %v806
    %v808 = vmul.f32 %v803, %v807
    %vm809 = vweird.f32 %v772
    %vm810 = vweird.f32 %v803
    %vm811 = vmor %vm809, %vm810
    %v812 = vsel %vm811, %v803, %v808
    %v813 = vmul.f32 %v765, %v782
    %v814 = vmul.f32 %v766, %v792
    %v815 = vmul.f32 %v767, %v802
    %v816 = vmul.f32 %v768, %v812
    %v818 = vperm.slane %v712, 0
    %v820 = vmul.f32 %v813, %v818
    %v821 = vmul.f32 %v814, %v818
    %v822 = vmul.f32 %v815, %v818
    %v823 = vmul.f32 %v816, %v818
    %v825 = vperm.slane %v713, 0
    %v827 = vadd.f32 %v820, %v825
    %v828 = vadd.f32 %v821, %v825
    %v829 = vadd.f32 %v822, %v825
    %v830 = vadd.f32 %v823, %v825
    %v831 = vld [vmem:[#allocation10] sm:$0xff]
    %v832 = vld [vmem:[#allocation10 + $0x8] sm:$0xff]
    %v833 = vld [vmem:[#allocation10 + $0x10] sm:$0xff]
    %v834 = vld [vmem:[#allocation10 + $0x18] sm:$0xff]
    %v835 = vld [vmem:[#allocation11] sm:$0xff]
    %v836 = vld [vmem:[#allocation11 + $0x8] sm:$0xff]
    %v837 = vld [vmem:[#allocation11 + $0x10] sm:$0xff]
    %v838 = vld [vmem:[#allocation11 + $0x18] sm:$0xff]
    %v840 = vsel %vm163, %v827, 0
    %v843 = vsel %vm163, %v828, 0
    %v846 = vsel %vm163, %v829, 0
    %v849 = vsel %vm163, %v830, 0
    %851 = vmatpush.msra.mxu0 0.0
    %852 = vmatpush.msra.mxu0 0.0
    %853 = vmatpush.msra.mxu0 0.0
    %854 = vmatpush.msra.mxu0 0.0
    %855 = vmatpush.msra.mxu0 0.0
    %856 = vmatpush.msra.mxu0 0.0
    %857 = vmatpush.msra.mxu0 0.0
    %858 = vmatpush.msra.mxu0 0.0
    %859 = vmatpush.msra.mxu0 0.0
    %860 = vmatpush.msra.mxu0 0.0
    %861 = vmatpush.msra.mxu0 0.0
    %862 = vmatpush.msra.mxu0 0.0
    %863 = vmatpush.msra.mxu0 %v838
    %864 = vmatpush.msra.mxu0 %v837
    %865 = vmatpush.msra.mxu0 %v836
    %866 = vmatpush.msra.mxu0 %v835
    %867 = vmatmul.f32.gmra.mxu0 %v840
    %v868 = vpop.f32.mrf.mxu0
    %v869 = vadd.f32 0.0, %v868
    %870 = vmatmul.f32.gmra.mxu0 %v843
    %v871 = vpop.f32.mrf.mxu0
    %v872 = vadd.f32 0.0, %v871
    %873 = vmatmul.f32.gmra.mxu0 %v846
    %v874 = vpop.f32.mrf.mxu0
    %v875 = vadd.f32 0.0, %v874
    %876 = vmatmul.f32.gmra.mxu0 %v849
    %v877 = vpop.f32.mrf.mxu0
    %v878 = vadd.f32 0.0, %v877
    %879 = vdwg.mxu0
    %880 = vmatpush.msra.mxu0 0.0
    %881 = vmatpush.msra.mxu0 0.0
    %882 = vmatpush.msra.mxu0 0.0
    %883 = vmatpush.msra.mxu0 0.0
    %884 = vmatpush.msra.mxu0 0.0
    %885 = vmatpush.msra.mxu0 0.0
    %886 = vmatpush.msra.mxu0 0.0
    %887 = vmatpush.msra.mxu0 0.0
    %888 = vmatpush.msra.mxu0 0.0
    %889 = vmatpush.msra.mxu0 0.0
    %890 = vmatpush.msra.mxu0 0.0
    %891 = vmatpush.msra.mxu0 0.0
    %892 = vmatpush.msra.mxu0 %v834
    %893 = vmatpush.msra.mxu0 %v833
    %894 = vmatpush.msra.mxu0 %v832
    %895 = vmatpush.msra.mxu0 %v831
    %896 = vmatmul.f32.gmra.mxu0 %v165
    %v897 = vpop.f32.mrf.mxu0
    %v898 = vadd.f32 %v869, %v897
    %899 = vmatmul.f32.gmra.mxu0 %v168
    %v900 = vpop.f32.mrf.mxu0
    %v901 = vadd.f32 %v872, %v900
    %902 = vmatmul.f32.gmra.mxu0 %v171
    %v903 = vpop.f32.mrf.mxu0
    %v904 = vadd.f32 %v875, %v903
    %905 = vmatmul.f32.gmra.mxu0 %v174
    %v906 = vpop.f32.mrf.mxu0
    %v907 = vadd.f32 %v878, %v906
    %908 = vdwg.mxu0
    %v909 = vmax.f32 %v898, 0.0
    %v910 = vmax.f32 %v901, 0.0
    %v911 = vmax.f32 %v904, 0.0
    %v912 = vmax.f32 %v907, 0.0
    %v913 = vld [vmem:[%s8] sm:$0xff]
    %v914 = vld [vmem:[%s8 + $0x8] sm:$0xff]
    %v915 = vld [vmem:[%s8 + $0x10] sm:$0xff]
    %v916 = vld [vmem:[%s8 + $0x18] sm:$0xff]
    %v917 = vld [vmem:[%s8 + $0x20] sm:$0xff]
    %v918 = vld [vmem:[%s8 + $0x28] sm:$0xff]
    %v919 = vld [vmem:[%s8 + $0x30] sm:$0xff]
    %v920 = vld [vmem:[%s8 + $0x38] sm:$0xff]
    %vm921 = vcmask 523264
    %v923 = vsel %vm921, %v909, 0
    %v926 = vsel %vm921, %v910, 0
    %v929 = vsel %vm921, %v911, 0
    %v932 = vsel %vm921, %v912, 0
    %934 = vmatpush.msra.mxu0 0.0
    %935 = vmatpush.msra.mxu0 0.0
    %936 = vmatpush.msra.mxu0 0.0
    %937 = vmatpush.msra.mxu0 0.0
    %938 = vmatpush.msra.mxu0 0.0
    %939 = vmatpush.msra.mxu0 0.0
    %940 = vmatpush.msra.mxu0 0.0
    %941 = vmatpush.msra.mxu0 0.0
    %942 = vmatpush.msra.mxu0 %v920
    %943 = vmatpush.msra.mxu0 %v919
    %944 = vmatpush.msra.mxu0 %v918
    %945 = vmatpush.msra.mxu0 %v917
    %946 = vmatpush.msra.mxu0 %v916
    %947 = vmatpush.msra.mxu0 %v915
    %948 = vmatpush.msra.mxu0 %v914
    %949 = vmatpush.msra.mxu0 %v913
    %950 = vmatmul.f32.gmra.mxu0 %v923
    %v951 = vpop.f32.mrf.mxu0
    %v952 = vadd.f32 0.0, %v951
    %953 = vmatmul.f32.gmra.mxu0 %v926
    %v954 = vpop.f32.mrf.mxu0
    %v955 = vadd.f32 0.0, %v954
    %956 = vmatmul.f32.gmra.mxu0 %v929
    %v957 = vpop.f32.mrf.mxu0
    %v958 = vadd.f32 0.0, %v957
    %959 = vmatmul.f32.gmra.mxu0 %v932
    %v960 = vpop.f32.mrf.mxu0
    %v961 = vadd.f32 0.0, %v960
    %962 = vdwg.mxu0
    %v963 = vld [vmem:[%s11] sm:$0x1]
    %v964 = vld [vmem:[%s12] sm:$0x1]
    %v965 = vsel %vm163, %v952, 0.0
    %966 = vadd.xlane.f32.xlu0 %v965
    %v967 = vpop.xlane.xlu0 %966
    %v968 = vsel %vm163, %v955, 0.0
    %969 = vadd.xlane.f32.xlu0 %v968
    %v970 = vpop.xlane.xlu0 %969
    %v971 = vsel %vm163, %v958, 0.0
    %972 = vadd.xlane.f32.xlu0 %v971
    %v973 = vpop.xlane.xlu0 %972
    %v974 = vsel %vm163, %v961, 0.0
    %975 = vadd.xlane.f32.xlu0 %v974
    %v976 = vpop.xlane.xlu0 %975
    %v977 = vmul.f32 %v967, %v732
    %v978 = vmul.f32 %v970, %v732
    %v979 = vmul.f32 %v973, %v732
    %v980 = vmul.f32 %v976, %v732
    %v981 = vmul.f32 %v952, %v952
    %v982 = vmul.f32 %v955, %v955
    %v983 = vmul.f32 %v958, %v958
    %v984 = vmul.f32 %v961, %v961
    %v985 = vsel %vm163, %v981, 0.0
    %986 = vadd.xlane.f32.xlu0 %v985
    %v987 = vpop.xlane.xlu0 %986
    %v988 = vsel %vm163, %v982, 0.0
    %989 = vadd.xlane.f32.xlu0 %v988
    %v990 = vpop.xlane.xlu0 %989
    %v991 = vsel %vm163, %v983, 0.0
    %992 = vadd.xlane.f32.xlu0 %v991
    %v993 = vpop.xlane.xlu0 %992
    %v994 = vsel %vm163, %v984, 0.0
    %995 = vadd.xlane.f32.xlu0 %v994
    %v996 = vpop.xlane.xlu0 %995
    %v997 = vmul.f32 %v987, %v732
    %v998 = vmul.f32 %v990, %v732
    %v999 = vmul.f32 %v993, %v732
    %v1000 = vmul.f32 %v996, %v732
    %v1001 = vmul.f32 %v977, %v977
    %v1002 = vmul.f32 %v978, %v978
    %v1003 = vmul.f32 %v979, %v979
    %v1004 = vmul.f32 %v980, %v980
    %v1005 = vsub.f32 %v997, %v1001
    %v1006 = vsub.f32 %v998, %v1002
    %v1007 = vsub.f32 %v999, %v1003
    %v1008 = vsub.f32 %v1000, %v1004
    %v1009 = vsub.f32 %v952, %v977
    %v1010 = vsub.f32 %v955, %v978
    %v1011 = vsub.f32 %v958, %v979
    %v1012 = vsub.f32 %v961, %v980
    %v1013 = vadd.f32 %v1005, 1e-05
    %v1014 = vadd.f32 %v1006, 1e-05
    %v1015 = vadd.f32 %v1007, 1e-05
    %v1016 = vadd.f32 %v1008, 1e-05
    %v1017 = vrsqrt.pop %v1013
    %v1018 = vmul.f32 %v1017, %v1013
    %v1019 = vmul.f32 %v1018, %v1017
    %v1020 = vmul.f32 0.5, %v1019
    %v1021 = vsub.f32 1.5, %v1020
    %v1022 = vmul.f32 %v1017, %v1021
    %vm1023 = vweird.f32 %v1013
    %vm1024 = vweird.f32 %v1017
    %vm1025 = vmor %vm1023, %vm1024
    %v1026 = vsel %vm1025, %v1017, %v1022
    %v1027 = vrsqrt.pop %v1014
    %v1028 = vmul.f32 %v1027, %v1014
    %v1029 = vmul.f32 %v1028, %v1027
    %v1030 = vmul.f32 0.5, %v1029
    %v1031 = vsub.f32 1.5, %v1030
    %v1032 = vmul.f32 %v1027, %v1031
    %vm1033 = vweird.f32 %v1014
    %vm1034 = vweird.f32 %v1027
    %vm1035 = vmor %vm1033, %vm1034
    %v1036 = vsel %vm1035, %v1027, %v1032
    %v1037 = vrsqrt.pop %v1015
    %v1038 = vmul.f32 %v1037, %v1015
    %v1039 = vmul.f32 %v1038, %v1037
    %v1040 = vmul.f32 0.5, %v1039
    %v1041 = vsub.f32 1.5, %v1040
    %v1042 = vmul.f32 %v1037, %v1041
    %vm1043 = vweird.f32 %v1015
    %vm1044 = vweird.f32 %v1037
    %vm1045 = vmor %vm1043, %vm1044
    %v1046 = vsel %vm1045, %v1037, %v1042
    %v1047 = vrsqrt.pop %v1016
    %v1048 = vmul.f32 %v1047, %v1016
    %v1049 = vmul.f32 %v1048, %v1047
    %v1050 = vmul.f32 0.5, %v1049
    %v1051 = vsub.f32 1.5, %v1050
    %v1052 = vmul.f32 %v1047, %v1051
    %vm1053 = vweird.f32 %v1016
    %vm1054 = vweird.f32 %v1047
    %vm1055 = vmor %vm1053, %vm1054
    %v1056 = vsel %vm1055, %v1047, %v1052
    %v1057 = vmul.f32 %v1009, %v1026
    %v1058 = vmul.f32 %v1010, %v1036
    %v1059 = vmul.f32 %v1011, %v1046
    %v1060 = vmul.f32 %v1012, %v1056
    %v1062 = vperm.slane %v963, 0
    %v1064 = vmul.f32 %v1057, %v1062
    %v1065 = vmul.f32 %v1058, %v1062
    %v1066 = vmul.f32 %v1059, %v1062
    %v1067 = vmul.f32 %v1060, %v1062
    %v1069 = vperm.slane %v964, 0
    %v1071 = vadd.f32 %v1064, %v1069
    %v1072 = vadd.f32 %v1065, %v1069
    %v1073 = vadd.f32 %v1066, %v1069
    %v1074 = vadd.f32 %v1067, %v1069
    %v1075 = vadd.f32 %v139, %v1071
    %v1076 = vadd.f32 %v140, %v1072
    %v1077 = vadd.f32 %v141, %v1073
    %v1078 = vadd.f32 %v142, %v1074
    %s1079 = scalar_lea.vmem %s4, 64
    %v1080 = vld [vmem:[%s1079] sm:$0xff]
    %v1081 = vld [vmem:[%s1079 + $0x8] sm:$0xff]
    %v1082 = vld [vmem:[%s1079 + $0x10] sm:$0xff]
    %v1083 = vld [vmem:[%s1079 + $0x18] sm:$0xff]
    %v1084 = vld [vmem:[%s1079 + $0x20] sm:$0xff]
    %v1085 = vld [vmem:[%s1079 + $0x28] sm:$0xff]
    %v1086 = vld [vmem:[%s1079 + $0x30] sm:$0xff]
    %v1087 = vld [vmem:[%s1079 + $0x38] sm:$0xff]
    %v1089 = vsel %vm163, %v1075, 0
    %v1092 = vsel %vm163, %v1076, 0
    %v1095 = vsel %vm163, %v1077, 0
    %v1098 = vsel %vm163, %v1078, 0
    %1100 = vmatpush.msra.mxu0 0.0
    %1101 = vmatpush.msra.mxu0 0.0
    %1102 = vmatpush.msra.mxu0 0.0
    %1103 = vmatpush.msra.mxu0 0.0
    %1104 = vmatpush.msra.mxu0 0.0
    %1105 = vmatpush.msra.mxu0 0.0
    %1106 = vmatpush.msra.mxu0 0.0
    %1107 = vmatpush.msra.mxu0 0.0
    %1108 = vmatpush.msra.mxu0 0.0
    %1109 = vmatpush.msra.mxu0 0.0
    %1110 = vmatpush.msra.mxu0 0.0
    %1111 = vmatpush.msra.mxu0 0.0
    %1112 = vmatpush.msra.mxu0 %v1086
    %1113 = vmatpush.msra.mxu0 %v1084
    %1114 = vmatpush.msra.mxu0 %v1082
    %1115 = vmatpush.msra.mxu0 %v1080
    %1116 = vmatmul.f32.gmra.mxu0 %v1089
    %v1117 = vpop.f32.mrf.mxu0
    %v1118 = vadd.f32 0.0, %v1117
    %1119 = vmatmul.f32.gmra.mxu0 %v1092
    %v1120 = vpop.f32.mrf.mxu0
    %v1121 = vadd.f32 0.0, %v1120
    %1122 = vmatmul.f32.gmra.mxu0 %v1095
    %v1123 = vpop.f32.mrf.mxu0
    %v1124 = vadd.f32 0.0, %v1123
    %1125 = vmatmul.f32.gmra.mxu0 %v1098
    %v1126 = vpop.f32.mrf.mxu0
    %v1127 = vadd.f32 0.0, %v1126
    %1128 = vdwg.mxu0
    %1129 = vmatpush.msra.mxu0 0.0
    %1130 = vmatpush.msra.mxu0 0.0
    %1131 = vmatpush.msra.mxu0 0.0
    %1132 = vmatpush.msra.mxu0 0.0
    %1133 = vmatpush.msra.mxu0 0.0
    %1134 = vmatpush.msra.mxu0 0.0
    %1135 = vmatpush.msra.mxu0 0.0
    %1136 = vmatpush.msra.mxu0 0.0
    %1137 = vmatpush.msra.mxu0 0.0
    %1138 = vmatpush.msra.mxu0 0.0
    %1139 = vmatpush.msra.mxu0 0.0
    %1140 = vmatpush.msra.mxu0 0.0
    %1141 = vmatpush.msra.mxu0 %v1087
    %1142 = vmatpush.msra.mxu0 %v1085
    %1143 = vmatpush.msra.mxu0 %v1083
    %1144 = vmatpush.msra.mxu0 %v1081
    %1145 = vmatmul.f32.gmra.mxu0 %v1089
    %v1146 = vpop.f32.mrf.mxu0
    %v1147 = vadd.f32 0.0, %v1146
    %1148 = vmatmul.f32.gmra.mxu0 %v1092
    %v1149 = vpop.f32.mrf.mxu0
    %v1150 = vadd.f32 0.0, %v1149
    %1151 = vmatmul.f32.gmra.mxu0 %v1095
    %v1152 = vpop.f32.mrf.mxu0
    %v1153 = vadd.f32 0.0, %v1152
    %1154 = vmatmul.f32.gmra.mxu0 %v1098
    %v1155 = vpop.f32.mrf.mxu0
    %v1156 = vadd.f32 0.0, %v1155
    %1157 = vdwg.mxu0
    %v1158 = vmul.f32 %v1118, %v143
    %v1159 = vmul.f32 %v1121, %v144
    %v1160 = vmul.f32 %v1124, %v145
    %v1161 = vmul.f32 %v1127, %v146
    %v1162 = vmul.f32 %v1118, %v243
    %v1163 = vmul.f32 %v1121, %v245
    %v1164 = vmul.f32 %v1124, %v247
    %v1165 = vmul.f32 %v1127, %v249
    %1170 = vrot.lane.b32.xlu0 %v1162, 64
    %v1171 = vpop.permute.xlu0 %1170
    %1172 = vrot.lane.b32.xlu0 %v1163, 64
    %v1173 = vpop.permute.xlu0 %1172
    %1174 = vrot.lane.b32.xlu0 %v1164, 64
    %v1175 = vpop.permute.xlu0 %1174
    %1176 = vrot.lane.b32.xlu0 %v1165, 64
    %v1177 = vpop.permute.xlu0 %1176
    %v1182 = vadd.f32 %v1158, %v1171
    %v1183 = vadd.f32 %v1159, %v1173
    %v1184 = vadd.f32 %v1160, %v1175
    %v1185 = vadd.f32 %v1161, %v1177
    %vm1186 = vcmp.gt.f32.partialorder %v1182, 0.0
    %vm1187 = vcmp.gt.f32.partialorder %v1183, 0.0
    %vm1188 = vcmp.gt.f32.partialorder %v1184, 0.0
    %vm1189 = vcmp.gt.f32.partialorder %v1185, 0.0
    %v1190 = vadd.f32 %v1182, 1.0
    %v1191 = vadd.f32 %v1183, 1.0
    %v1192 = vadd.f32 %v1184, 1.0
    %v1193 = vadd.f32 %v1185, 1.0
    %v1194 = vmin.f32 %v1182, 0.0
    %v1195 = vmin.f32 %v1183, 0.0
    %v1196 = vmin.f32 %v1184, 0.0
    %v1197 = vmin.f32 %v1185, 0.0
    %v1198 = vmul.f32 %v1194, 1.442695
    %v1199 = vpow.pop %v1198
    %v1200 = vmul.f32 %v1195, 1.442695
    %v1201 = vpow.pop %v1200
    %v1202 = vmul.f32 %v1196, 1.442695
    %v1203 = vpow.pop %v1202
    %v1204 = vmul.f32 %v1197, 1.442695
    %v1205 = vpow.pop %v1204
    %v1206 = vsel %vm1186, %v1190, %v1199
    %v1207 = vsel %vm1187, %v1191, %v1201
    %v1208 = vsel %vm1188, %v1192, %v1203
    %v1209 = vsel %vm1189, %v1193, %v1205
    %v1210 = vmul.f32 %v1147, 0.0625
    %v1211 = vmul.f32 %v1150, 0.0625
    %1214 = vrot.lane.b32.xlu0 %v1206, 96
    %v1215 = vpop.permute.xlu0 %1214
    %1216 = vrot.lane.b32.xlu0 %v1207, 96
    %v1217 = vpop.permute.xlu0 %1216
    %1220 = vxpose.xlu0.b32.start [1/16] %v1215, 128
    %1221 = vxpose.xlu0.b32.cont [2/16] %v1217, 128
    %1222 = vxpose.xlu0.b32.cont [3/16] 0.0, 128
    %1223 = vxpose.xlu0.b32.cont [4/16] 0.0, 128
    %1224 = vxpose.xlu0.b32.cont [5/16] 0.0, 128
    %1225 = vxpose.xlu0.b32.cont [6/16] 0.0, 128
    %1226 = vxpose.xlu0.b32.cont [7/16] 0.0, 128
    %1227 = vxpose.xlu0.b32.cont [8/16] 0.0, 128
    %1228 = vxpose.xlu0.b32.cont [9/16] 0.0, 128
    %1229 = vxpose.xlu0.b32.cont [10/16] 0.0, 128
    %1230 = vxpose.xlu0.b32.cont [11/16] 0.0, 128
    %1231 = vxpose.xlu0.b32.cont [12/16] 0.0, 128
    %1232 = vxpose.xlu0.b32.cont [13/16] 0.0, 128
    %1233 = vxpose.xlu0.b32.cont [14/16] 0.0, 128
    %1234 = vxpose.xlu0.b32.cont [15/16] 0.0, 128
    %1235 = vxpose.xlu0.b32.end [16/16] 0.0, 128
    %v1236 = vpop.trf.xlu0
    %v1237 = vpop.trf.xlu0
    %v1238 = vpop.trf.xlu0
    %v1239 = vpop.trf.xlu0
    %v1240 = vpop.trf.xlu0
    %v1241 = vpop.trf.xlu0
    %v1242 = vpop.trf.xlu0
    %v1243 = vpop.trf.xlu0
    %v1244 = vpop.trf.xlu0
    %v1245 = vpop.trf.xlu0
    %v1246 = vpop.trf.xlu0
    %v1247 = vpop.trf.xlu0
    %v1248 = vpop.trf.xlu0
    %v1249 = vpop.trf.xlu0
    %v1250 = vpop.trf.xlu0
    %v1251 = vpop.trf.xlu0
    %v1253 = vsel %vm344, %v1236, 0
    %v1256 = vsel %vm344, %v1237, 0
    %v1259 = vsel %vm344, %v1238, 0
    %v1262 = vsel %vm344, %v1239, 0
    %1264 = vmatpush.msra.mxu0 0.0
    %1265 = vmatpush.msra.mxu0 0.0
    %1266 = vmatpush.msra.mxu0 0.0
    %1267 = vmatpush.msra.mxu0 0.0
    %1268 = vmatpush.msra.mxu0 0.0
    %1269 = vmatpush.msra.mxu0 0.0
    %1270 = vmatpush.msra.mxu0 0.0
    %1271 = vmatpush.msra.mxu0 0.0
    %1272 = vmatpush.msra.mxu0 0.0
    %1273 = vmatpush.msra.mxu0 0.0
    %1274 = vmatpush.msra.mxu0 0.0
    %1275 = vmatpush.msra.mxu0 0.0
    %1276 = vmatpush.msra.mxu0 0.0
    %1277 = vmatpush.msra.mxu0 0.0
    %1278 = vmatpush.msra.mxu0 %v1211
    %1279 = vmatpush.msra.mxu0 %v1210
    %1280 = vmatmul.f32.gmra.mxu0 %v1253
    %v1281 = vpop.f32.mrf.mxu0
    %v1282 = vadd.f32 0.0, %v1281
    %1283 = vmatmul.f32.gmra.mxu0 %v1256
    %v1284 = vpop.f32.mrf.mxu0
    %v1285 = vadd.f32 0.0, %v1284
    %1286 = vmatmul.f32.gmra.mxu0 %v1259
    %v1287 = vpop.f32.mrf.mxu0
    %v1288 = vadd.f32 0.0, %v1287
    %1289 = vmatmul.f32.gmra.mxu0 %v1262
    %v1290 = vpop.f32.mrf.mxu0
    %v1291 = vadd.f32 0.0, %v1290
    %1292 = vdwg.mxu0
    %v1293 = vmul.f32 %v1282, %v151
    %v1294 = vmul.f32 %v1285, %v152
    %v1295 = vmul.f32 %v1288, %v153
    %v1296 = vmul.f32 %v1291, %v154
    %v1297 = vsel %vm163, %v1206, 0
    %v1299 = vsel %vm163, %v1207, 0
    %1301 = vmatpush.msra.mxu0 0.0
    %1302 = vmatpush.msra.mxu0 0.0
    %1303 = vmatpush.msra.mxu0 0.0
    %1304 = vmatpush.msra.mxu0 0.0
    %1305 = vmatpush.msra.mxu0 0.0
    %1306 = vmatpush.msra.mxu0 0.0
    %1307 = vmatpush.msra.mxu0 0.0
    %1308 = vmatpush.msra.mxu0 0.0
    %1309 = vmatpush.msra.mxu0 0.0
    %1310 = vmatpush.msra.mxu0 0.0
    %1311 = vmatpush.msra.mxu0 0.0
    %1312 = vmatpush.msra.mxu0 0.0
    %1313 = vmatpush.msra.mxu0 %v1296
    %1314 = vmatpush.msra.mxu0 %v1295
    %1315 = vmatpush.msra.mxu0 %v1294
    %1316 = vmatpush.msra.mxu0 %v1293
    %1317 = vmatmul.f32.gmra.mxu0 %v1297
    %v1318 = vpop.f32.mrf.mxu0
    %v1319 = vadd.f32 0.0, %v1318
    %1320 = vmatmul.f32.gmra.mxu0 %v1299
    %v1321 = vpop.f32.mrf.mxu0
    %v1322 = vadd.f32 0.0, %v1321
    %1323 = vdwg.mxu0
    %v1324 = vsel %vm417, %v1206, 0.0
    %v1325 = vsel %vm417, %v1207, 0.0
    %v1326 = vadd.f32 %v1324, %v1325
    %v1327 = vrot.slane %v1326, 4
    %v1328 = vadd.f32 %v1326, %v1327
    %v1329 = vrot.slane %v1328, 2
    %v1330 = vadd.f32 %v1328, %v1329
    %v1331 = vrot.slane %v1330, 1
    %v1332 = vadd.f32 %v1330, %v1331
    %1334 = vrot.lane.b32.xlu0 %v1332, 96
    %v1335 = vpop.permute.xlu0 %1334
    %v1337 = vmul.f32 %v1206, %v1335
    %v1338 = vmul.f32 %v1207, %v1335
    %v1339 = vmul.f32 %v1153, 0.0625
    %v1340 = vmul.f32 %v1156, 0.0625
    %1343 = vrot.lane.b32.xlu0 %v1208, 96
    %v1344 = vpop.permute.xlu0 %1343
    %1345 = vrot.lane.b32.xlu0 %v1209, 96
    %v1346 = vpop.permute.xlu0 %1345
    %1349 = vxpose.xlu0.b32.start [1/16] %v1344, 128
    %1350 = vxpose.xlu0.b32.cont [2/16] %v1346, 128
    %1351 = vxpose.xlu0.b32.cont [3/16] 0.0, 128
    %1352 = vxpose.xlu0.b32.cont [4/16] 0.0, 128
    %1353 = vxpose.xlu0.b32.cont [5/16] 0.0, 128
    %1354 = vxpose.xlu0.b32.cont [6/16] 0.0, 128
    %1355 = vxpose.xlu0.b32.cont [7/16] 0.0, 128
    %1356 = vxpose.xlu0.b32.cont [8/16] 0.0, 128
    %1357 = vxpose.xlu0.b32.cont [9/16] 0.0, 128
    %1358 = vxpose.xlu0.b32.cont [10/16] 0.0, 128
    %1359 = vxpose.xlu0.b32.cont [11/16] 0.0, 128
    %1360 = vxpose.xlu0.b32.cont [12/16] 0.0, 128
    %1361 = vxpose.xlu0.b32.cont [13/16] 0.0, 128
    %1362 = vxpose.xlu0.b32.cont [14/16] 0.0, 128
    %1363 = vxpose.xlu0.b32.cont [15/16] 0.0, 128
    %1364 = vxpose.xlu0.b32.end [16/16] 0.0, 128
    %v1365 = vpop.trf.xlu0
    %v1366 = vpop.trf.xlu0
    %v1367 = vpop.trf.xlu0
    %v1368 = vpop.trf.xlu0
    %v1369 = vpop.trf.xlu0
    %v1370 = vpop.trf.xlu0
    %v1371 = vpop.trf.xlu0
    %v1372 = vpop.trf.xlu0
    %v1373 = vpop.trf.xlu0
    %v1374 = vpop.trf.xlu0
    %v1375 = vpop.trf.xlu0
    %v1376 = vpop.trf.xlu0
    %v1377 = vpop.trf.xlu0
    %v1378 = vpop.trf.xlu0
    %v1379 = vpop.trf.xlu0
    %v1380 = vpop.trf.xlu0
    %v1382 = vsel %vm344, %v1365, 0
    %v1385 = vsel %vm344, %v1366, 0
    %v1388 = vsel %vm344, %v1367, 0
    %v1391 = vsel %vm344, %v1368, 0
    %1393 = vmatpush.msra.mxu0 0.0
    %1394 = vmatpush.msra.mxu0 0.0
    %1395 = vmatpush.msra.mxu0 0.0
    %1396 = vmatpush.msra.mxu0 0.0
    %1397 = vmatpush.msra.mxu0 0.0
    %1398 = vmatpush.msra.mxu0 0.0
    %1399 = vmatpush.msra.mxu0 0.0
    %1400 = vmatpush.msra.mxu0 0.0
    %1401 = vmatpush.msra.mxu0 0.0
    %1402 = vmatpush.msra.mxu0 0.0
    %1403 = vmatpush.msra.mxu0 0.0
    %1404 = vmatpush.msra.mxu0 0.0
    %1405 = vmatpush.msra.mxu0 0.0
    %1406 = vmatpush.msra.mxu0 0.0
    %1407 = vmatpush.msra.mxu0 %v1340
    %1408 = vmatpush.msra.mxu0 %v1339
    %1409 = vmatmul.f32.gmra.mxu0 %v1382
    %v1410 = vpop.f32.mrf.mxu0
    %v1411 = vadd.f32 0.0, %v1410
    %1412 = vmatmul.f32.gmra.mxu0 %v1385
    %v1413 = vpop.f32.mrf.mxu0
    %v1414 = vadd.f32 0.0, %v1413
    %1415 = vmatmul.f32.gmra.mxu0 %v1388
    %v1416 = vpop.f32.mrf.mxu0
    %v1417 = vadd.f32 0.0, %v1416
    %1418 = vmatmul.f32.gmra.mxu0 %v1391
    %v1419 = vpop.f32.mrf.mxu0
    %v1420 = vadd.f32 0.0, %v1419
    %1421 = vdwg.mxu0
    %v1422 = vmul.f32 %v1411, %v151
    %v1423 = vmul.f32 %v1414, %v152
    %v1424 = vmul.f32 %v1417, %v153
    %v1425 = vmul.f32 %v1420, %v154
    %v1426 = vsel %vm163, %v1208, 0
    %v1428 = vsel %vm163, %v1209, 0
    %1430 = vmatpush.msra.mxu0 0.0
    %1431 = vmatpush.msra.mxu0 0.0
    %1432 = vmatpush.msra.mxu0 0.0
    %1433 = vmatpush.msra.mxu0 0.0
    %1434 = vmatpush.msra.mxu0 0.0
    %1435 = vmatpush.msra.mxu0 0.0
    %1436 = vmatpush.msra.mxu0 0.0
    %1437 = vmatpush.msra.mxu0 0.0
    %1438 = vmatpush.msra.mxu0 0.0
    %1439 = vmatpush.msra.mxu0 0.0
    %1440 = vmatpush.msra.mxu0 0.0
    %1441 = vmatpush.msra.mxu0 0.0
    %1442 = vmatpush.msra.mxu0 %v1425
    %1443 = vmatpush.msra.mxu0 %v1424
    %1444 = vmatpush.msra.mxu0 %v1423
    %1445 = vmatpush.msra.mxu0 %v1422
    %1446 = vmatmul.f32.gmra.mxu0 %v1426
    %v1447 = vpop.f32.mrf.mxu0
    %v1448 = vadd.f32 0.0, %v1447
    %1449 = vmatmul.f32.gmra.mxu0 %v1428
    %v1450 = vpop.f32.mrf.mxu0
    %v1451 = vadd.f32 0.0, %v1450
    %1452 = vdwg.mxu0
    %v1453 = vsel %vm417, %v1208, 0.0
    %v1454 = vsel %vm417, %v1209, 0.0
    %v1455 = vadd.f32 %v1453, %v1454
    %v1456 = vrot.slane %v1455, 4
    %v1457 = vadd.f32 %v1455, %v1456
    %v1458 = vrot.slane %v1457, 2
    %v1459 = vadd.f32 %v1457, %v1458
    %v1460 = vrot.slane %v1459, 1
    %v1461 = vadd.f32 %v1459, %v1460
    %1463 = vrot.lane.b32.xlu0 %v1461, 96
    %v1464 = vpop.permute.xlu0 %1463
    %v1466 = vmul.f32 %v1208, %v1464
    %v1467 = vmul.f32 %v1209, %v1464
    %v1469 = vsel %vm163, %v1337, 0
    %v1472 = vsel %vm163, %v1338, 0
    %v1475 = vsel %vm163, %v1466, 0
    %v1478 = vsel %vm163, %v1467, 0
    %1480 = vmatpush.msra.mxu0 0.0
    %1481 = vmatpush.msra.mxu0 0.0
    %1482 = vmatpush.msra.mxu0 0.0
    %1483 = vmatpush.msra.mxu0 0.0
    %1484 = vmatpush.msra.mxu0 0.0
    %1485 = vmatpush.msra.mxu0 0.0
    %1486 = vmatpush.msra.mxu0 0.0
    %1487 = vmatpush.msra.mxu0 0.0
    %1488 = vmatpush.msra.mxu0 0.0
    %1489 = vmatpush.msra.mxu0 0.0
    %1490 = vmatpush.msra.mxu0 0.0
    %1491 = vmatpush.msra.mxu0 0.0
    %1492 = vmatpush.msra.mxu0 %v154
    %1493 = vmatpush.msra.mxu0 %v153
    %1494 = vmatpush.msra.mxu0 %v152
    %1495 = vmatpush.msra.mxu0 %v151
    %1496 = vmatmul.f32.gmra.mxu0 %v1469
    %v1497 = vpop.f32.mrf.mxu0
    %v1498 = vadd.f32 1e-06, %v1497
    %1499 = vmatmul.f32.gmra.mxu0 %v1472
    %v1500 = vpop.f32.mrf.mxu0
    %v1501 = vadd.f32 1e-06, %v1500
    %1502 = vmatmul.f32.gmra.mxu0 %v1475
    %v1503 = vpop.f32.mrf.mxu0
    %v1504 = vadd.f32 1e-06, %v1503
    %1505 = vmatmul.f32.gmra.mxu0 %v1478
    %v1506 = vpop.f32.mrf.mxu0
    %v1507 = vadd.f32 1e-06, %v1506
    %1508 = vdwg.mxu0
    %v1509 = vrcp.pop %v1498
    %v1510 = vmul.f32 %v1498, %v1509
    %v1511 = vsub.f32 1.0, %v1510
    %v1512 = vmul.f32 %v1509, %v1511
    %v1513 = vadd.f32 %v1509, %v1512
    %vm1514 = vweird.f32 %v1498
    %vm1515 = vweird.f32 %v1509
    %vm1516 = vmor %vm1514, %vm1515
    %v1517 = vsel %vm1516, %v1509, %v1513
    %v1518 = vand.u32 2147483647, %v1498
    %vm1519 = vcmp.eq.f32.partialorder %v1518, 8.507059e+37
    %v1520 = vand.u32 %v1498, 2147483648
    %v1521 = vor.u32 1.1754944e-38, %v1520
    %v1522 = vsel %vm1519, %v1521, %v1517
    %v1523 = vmul.f32 16.0, %v1522
    %v1524 = vrcp.pop %v1501
    %v1525 = vmul.f32 %v1501, %v1524
    %v1526 = vsub.f32 1.0, %v1525
    %v1527 = vmul.f32 %v1524, %v1526
    %v1528 = vadd.f32 %v1524, %v1527
    %vm1529 = vweird.f32 %v1501
    %vm1530 = vweird.f32 %v1524
    %vm1531 = vmor %vm1529, %vm1530
    %v1532 = vsel %vm1531, %v1524, %v1528
    %v1533 = vand.u32 2147483647, %v1501
    %vm1534 = vcmp.eq.f32.partialorder %v1533, 8.507059e+37
    %v1535 = vand.u32 %v1501, 2147483648
    %v1536 = vor.u32 1.1754944e-38, %v1535
    %v1537 = vsel %vm1534, %v1536, %v1532
    %v1538 = vmul.f32 16.0, %v1537
    %v1539 = vrcp.pop %v1504
    %v1540 = vmul.f32 %v1504, %v1539
    %v1541 = vsub.f32 1.0, %v1540
    %v1542 = vmul.f32 %v1539, %v1541
    %v1543 = vadd.f32 %v1539, %v1542
    %vm1544 = vweird.f32 %v1504
    %vm1545 = vweird.f32 %v1539
    %vm1546 = vmor %vm1544, %vm1545
    %v1547 = vsel %vm1546, %v1539, %v1543
    %v1548 = vand.u32 2147483647, %v1504
    %vm1549 = vcmp.eq.f32.partialorder %v1548, 8.507059e+37
    %v1550 = vand.u32 %v1504, 2147483648
    %v1551 = vor.u32 1.1754944e-38, %v1550
    %v1552 = vsel %vm1549, %v1551, %v1547
    %v1553 = vmul.f32 16.0, %v1552
    %v1554 = vrcp.pop %v1507
    %v1555 = vmul.f32 %v1507, %v1554
    %v1556 = vsub.f32 1.0, %v1555
    %v1557 = vmul.f32 %v1554, %v1556
    %v1558 = vadd.f32 %v1554, %v1557
    %vm1559 = vweird.f32 %v1507
    %vm1560 = vweird.f32 %v1554
    %vm1561 = vmor %vm1559, %vm1560
    %v1562 = vsel %vm1561, %v1554, %v1558
    %v1563 = vand.u32 2147483647, %v1507
    %vm1564 = vcmp.eq.f32.partialorder %v1563, 8.507059e+37
    %v1565 = vand.u32 %v1507, 2147483648
    %v1566 = vor.u32 1.1754944e-38, %v1565
    %v1567 = vsel %vm1564, %v1566, %v1562
    %v1568 = vmul.f32 16.0, %v1567
    %v1569 = vmul.f32 %v1319, %v1523
    %v1570 = vmul.f32 %v1322, %v1538
    %v1571 = vmul.f32 %v1448, %v1553
    %v1572 = vmul.f32 %v1451, %v1568
    %s1573 = scalar_lea.vmem %s5, 32
    %v1574 = vld [vmem:[%s1573] sm:$0xff]
    %v1575 = vld [vmem:[%s1573 + $0x8] sm:$0xff]
    %v1576 = vld [vmem:[%s1573 + $0x10] sm:$0xff]
    %v1577 = vld [vmem:[%s1573 + $0x18] sm:$0xff]
    %v1579 = vsel %vm163, %v1569, 0
    %v1582 = vsel %vm163, %v1570, 0
    %v1585 = vsel %vm163, %v1571, 0
    %v1588 = vsel %vm163, %v1572, 0
    %1590 = vmatpush.msra.mxu0 0.0
    %1591 = vmatpush.msra.mxu0 0.0
    %1592 = vmatpush.msra.mxu0 0.0
    %1593 = vmatpush.msra.mxu0 0.0
    %1594 = vmatpush.msra.mxu0 0.0
    %1595 = vmatpush.msra.mxu0 0.0
    %1596 = vmatpush.msra.mxu0 0.0
    %1597 = vmatpush.msra.mxu0 0.0
    %1598 = vmatpush.msra.mxu0 0.0
    %1599 = vmatpush.msra.mxu0 0.0
    %1600 = vmatpush.msra.mxu0 0.0
    %1601 = vmatpush.msra.mxu0 0.0
    %1602 = vmatpush.msra.mxu0 %v1577
    %1603 = vmatpush.msra.mxu0 %v1576
    %1604 = vmatpush.msra.mxu0 %v1575
    %1605 = vmatpush.msra.mxu0 %v1574
    %1606 = vmatmul.f32.gmra.mxu0 %v1579
    %v1607 = vpop.f32.mrf.mxu0
    %v1608 = vadd.f32 0.0, %v1607
    %1609 = vmatmul.f32.gmra.mxu0 %v1582
    %v1610 = vpop.f32.mrf.mxu0
    %v1611 = vadd.f32 0.0, %v1610
    %1612 = vmatmul.f32.gmra.mxu0 %v1585
    %v1613 = vpop.f32.mrf.mxu0
    %v1614 = vadd.f32 0.0, %v1613
    %1615 = vmatmul.f32.gmra.mxu0 %v1588
    %v1616 = vpop.f32.mrf.mxu0
    %v1617 = vadd.f32 0.0, %v1616
    %1618 = vdwg.mxu0
    %s1619 = scalar_lea.vmem %s9, 1
    %v1620 = vld [vmem:[%s1619] sm:$0x1]
    %s1621 = scalar_lea.vmem %s10, 1
    %v1622 = vld [vmem:[%s1621] sm:$0x1]
    %v1623 = vsel %vm163, %v1608, 0.0
    %1624 = vadd.xlane.f32.xlu0 %v1623
    %v1625 = vpop.xlane.xlu0 %1624
    %v1626 = vsel %vm163, %v1611, 0.0
    %1627 = vadd.xlane.f32.xlu0 %v1626
    %v1628 = vpop.xlane.xlu0 %1627
    %v1629 = vsel %vm163, %v1614, 0.0
    %1630 = vadd.xlane.f32.xlu0 %v1629
    %v1631 = vpop.xlane.xlu0 %1630
    %v1632 = vsel %vm163, %v1617, 0.0
    %1633 = vadd.xlane.f32.xlu0 %v1632
    %v1634 = vpop.xlane.xlu0 %1633
    %v1635 = vmul.f32 %v1625, %v732
    %v1636 = vmul.f32 %v1628, %v732
    %v1637 = vmul.f32 %v1631, %v732
    %v1638 = vmul.f32 %v1634, %v732
    %v1639 = vmul.f32 %v1608, %v1608
    %v1640 = vmul.f32 %v1611, %v1611
    %v1641 = vmul.f32 %v1614, %v1614
    %v1642 = vmul.f32 %v1617, %v1617
    %v1643 = vsel %vm163, %v1639, 0.0
    %1644 = vadd.xlane.f32.xlu0 %v1643
    %v1645 = vpop.xlane.xlu0 %1644
    %v1646 = vsel %vm163, %v1640, 0.0
    %1647 = vadd.xlane.f32.xlu0 %v1646
    %v1648 = vpop.xlane.xlu0 %1647
    %v1649 = vsel %vm163, %v1641, 0.0
    %1650 = vadd.xlane.f32.xlu0 %v1649
    %v1651 = vpop.xlane.xlu0 %1650
    %v1652 = vsel %vm163, %v1642, 0.0
    %1653 = vadd.xlane.f32.xlu0 %v1652
    %v1654 = vpop.xlane.xlu0 %1653
    %v1655 = vmul.f32 %v1645, %v732
    %v1656 = vmul.f32 %v1648, %v732
    %v1657 = vmul.f32 %v1651, %v732
    %v1658 = vmul.f32 %v1654, %v732
    %v1659 = vmul.f32 %v1635, %v1635
    %v1660 = vmul.f32 %v1636, %v1636
    %v1661 = vmul.f32 %v1637, %v1637
    %v1662 = vmul.f32 %v1638, %v1638
    %v1663 = vsub.f32 %v1655, %v1659
    %v1664 = vsub.f32 %v1656, %v1660
    %v1665 = vsub.f32 %v1657, %v1661
    %v1666 = vsub.f32 %v1658, %v1662
    %v1667 = vsub.f32 %v1608, %v1635
    %v1668 = vsub.f32 %v1611, %v1636
    %v1669 = vsub.f32 %v1614, %v1637
    %v1670 = vsub.f32 %v1617, %v1638
    %v1671 = vadd.f32 %v1663, 1e-05
    %v1672 = vadd.f32 %v1664, 1e-05
    %v1673 = vadd.f32 %v1665, 1e-05
    %v1674 = vadd.f32 %v1666, 1e-05
    %v1675 = vrsqrt.pop %v1671
    %v1676 = vmul.f32 %v1675, %v1671
    %v1677 = vmul.f32 %v1676, %v1675
    %v1678 = vmul.f32 0.5, %v1677
    %v1679 = vsub.f32 1.5, %v1678
    %v1680 = vmul.f32 %v1675, %v1679
    %vm1681 = vweird.f32 %v1671
    %vm1682 = vweird.f32 %v1675
    %vm1683 = vmor %vm1681, %vm1682
    %v1684 = vsel %vm1683, %v1675, %v1680
    %v1685 = vrsqrt.pop %v1672
    %v1686 = vmul.f32 %v1685, %v1672
    %v1687 = vmul.f32 %v1686, %v1685
    %v1688 = vmul.f32 0.5, %v1687
    %v1689 = vsub.f32 1.5, %v1688
    %v1690 = vmul.f32 %v1685, %v1689
    %vm1691 = vweird.f32 %v1672
    %vm1692 = vweird.f32 %v1685
    %vm1693 = vmor %vm1691, %vm1692
    %v1694 = vsel %vm1693, %v1685, %v1690
    %v1695 = vrsqrt.pop %v1673
    %v1696 = vmul.f32 %v1695, %v1673
    %v1697 = vmul.f32 %v1696, %v1695
    %v1698 = vmul.f32 0.5, %v1697
    %v1699 = vsub.f32 1.5, %v1698
    %v1700 = vmul.f32 %v1695, %v1699
    %vm1701 = vweird.f32 %v1673
    %vm1702 = vweird.f32 %v1695
    %vm1703 = vmor %vm1701, %vm1702
    %v1704 = vsel %vm1703, %v1695, %v1700
    %v1705 = vrsqrt.pop %v1674
    %v1706 = vmul.f32 %v1705, %v1674
    %v1707 = vmul.f32 %v1706, %v1705
    %v1708 = vmul.f32 0.5, %v1707
    %v1709 = vsub.f32 1.5, %v1708
    %v1710 = vmul.f32 %v1705, %v1709
    %vm1711 = vweird.f32 %v1674
    %vm1712 = vweird.f32 %v1705
    %vm1713 = vmor %vm1711, %vm1712
    %v1714 = vsel %vm1713, %v1705, %v1710
    %v1715 = vmul.f32 %v1667, %v1684
    %v1716 = vmul.f32 %v1668, %v1694
    %v1717 = vmul.f32 %v1669, %v1704
    %v1718 = vmul.f32 %v1670, %v1714
    %v1720 = vperm.slane %v1620, 0
    %v1722 = vmul.f32 %v1715, %v1720
    %v1723 = vmul.f32 %v1716, %v1720
    %v1724 = vmul.f32 %v1717, %v1720
    %v1725 = vmul.f32 %v1718, %v1720
    %v1727 = vperm.slane %v1622, 0
    %v1729 = vadd.f32 %v1722, %v1727
    %v1730 = vadd.f32 %v1723, %v1727
    %v1731 = vadd.f32 %v1724, %v1727
    %v1732 = vadd.f32 %v1725, %v1727
    %s1733 = scalar_lea.vmem [#allocation10], 32
    %v1734 = vld [vmem:[%s1733] sm:$0xff]
    %v1735 = vld [vmem:[%s1733 + $0x8] sm:$0xff]
    %v1736 = vld [vmem:[%s1733 + $0x10] sm:$0xff]
    %v1737 = vld [vmem:[%s1733 + $0x18] sm:$0xff]
    %s1738 = scalar_lea.vmem [#allocation11], 32
    %v1739 = vld [vmem:[%s1738] sm:$0xff]
    %v1740 = vld [vmem:[%s1738 + $0x8] sm:$0xff]
    %v1741 = vld [vmem:[%s1738 + $0x10] sm:$0xff]
    %v1742 = vld [vmem:[%s1738 + $0x18] sm:$0xff]
    %v1744 = vsel %vm163, %v1729, 0
    %v1747 = vsel %vm163, %v1730, 0
    %v1750 = vsel %vm163, %v1731, 0
    %v1753 = vsel %vm163, %v1732, 0
    %1755 = vmatpush.msra.mxu0 0.0
    %1756 = vmatpush.msra.mxu0 0.0
    %1757 = vmatpush.msra.mxu0 0.0
    %1758 = vmatpush.msra.mxu0 0.0
    %1759 = vmatpush.msra.mxu0 0.0
    %1760 = vmatpush.msra.mxu0 0.0
    %1761 = vmatpush.msra.mxu0 0.0
    %1762 = vmatpush.msra.mxu0 0.0
    %1763 = vmatpush.msra.mxu0 0.0
    %1764 = vmatpush.msra.mxu0 0.0
    %1765 = vmatpush.msra.mxu0 0.0
    %1766 = vmatpush.msra.mxu0 0.0
    %1767 = vmatpush.msra.mxu0 %v1742
    %1768 = vmatpush.msra.mxu0 %v1741
    %1769 = vmatpush.msra.mxu0 %v1740
    %1770 = vmatpush.msra.mxu0 %v1739
    %1771 = vmatmul.f32.gmra.mxu0 %v1744
    %v1772 = vpop.f32.mrf.mxu0
    %v1773 = vadd.f32 0.0, %v1772
    %1774 = vmatmul.f32.gmra.mxu0 %v1747
    %v1775 = vpop.f32.mrf.mxu0
    %v1776 = vadd.f32 0.0, %v1775
    %1777 = vmatmul.f32.gmra.mxu0 %v1750
    %v1778 = vpop.f32.mrf.mxu0
    %v1779 = vadd.f32 0.0, %v1778
    %1780 = vmatmul.f32.gmra.mxu0 %v1753
    %v1781 = vpop.f32.mrf.mxu0
    %v1782 = vadd.f32 0.0, %v1781
    %1783 = vdwg.mxu0
    %1784 = vmatpush.msra.mxu0 0.0
    %1785 = vmatpush.msra.mxu0 0.0
    %1786 = vmatpush.msra.mxu0 0.0
    %1787 = vmatpush.msra.mxu0 0.0
    %1788 = vmatpush.msra.mxu0 0.0
    %1789 = vmatpush.msra.mxu0 0.0
    %1790 = vmatpush.msra.mxu0 0.0
    %1791 = vmatpush.msra.mxu0 0.0
    %1792 = vmatpush.msra.mxu0 0.0
    %1793 = vmatpush.msra.mxu0 0.0
    %1794 = vmatpush.msra.mxu0 0.0
    %1795 = vmatpush.msra.mxu0 0.0
    %1796 = vmatpush.msra.mxu0 %v1737
    %1797 = vmatpush.msra.mxu0 %v1736
    %1798 = vmatpush.msra.mxu0 %v1735
    %1799 = vmatpush.msra.mxu0 %v1734
    %1800 = vmatmul.f32.gmra.mxu0 %v1089
    %v1801 = vpop.f32.mrf.mxu0
    %v1802 = vadd.f32 %v1773, %v1801
    %1803 = vmatmul.f32.gmra.mxu0 %v1092
    %v1804 = vpop.f32.mrf.mxu0
    %v1805 = vadd.f32 %v1776, %v1804
    %1806 = vmatmul.f32.gmra.mxu0 %v1095
    %v1807 = vpop.f32.mrf.mxu0
    %v1808 = vadd.f32 %v1779, %v1807
    %1809 = vmatmul.f32.gmra.mxu0 %v1098
    %v1810 = vpop.f32.mrf.mxu0
    %v1811 = vadd.f32 %v1782, %v1810
    %1812 = vdwg.mxu0
    %v1813 = vmax.f32 %v1802, 0.0
    %v1814 = vmax.f32 %v1805, 0.0
    %v1815 = vmax.f32 %v1808, 0.0
    %v1816 = vmax.f32 %v1811, 0.0
    %s1817 = scalar_lea.vmem %s8, 64
    %v1818 = vld [vmem:[%s1817] sm:$0xff]
    %v1819 = vld [vmem:[%s1817 + $0x8] sm:$0xff]
    %v1820 = vld [vmem:[%s1817 + $0x10] sm:$0xff]
    %v1821 = vld [vmem:[%s1817 + $0x18] sm:$0xff]
    %v1822 = vld [vmem:[%s1817 + $0x20] sm:$0xff]
    %v1823 = vld [vmem:[%s1817 + $0x28] sm:$0xff]
    %v1824 = vld [vmem:[%s1817 + $0x30] sm:$0xff]
    %v1825 = vld [vmem:[%s1817 + $0x38] sm:$0xff]
    %v1827 = vsel %vm921, %v1813, 0
    %v1830 = vsel %vm921, %v1814, 0
    %v1833 = vsel %vm921, %v1815, 0
    %v1836 = vsel %vm921, %v1816, 0
    %1838 = vmatpush.msra.mxu0 0.0
    %1839 = vmatpush.msra.mxu0 0.0
    %1840 = vmatpush.msra.mxu0 0.0
    %1841 = vmatpush.msra.mxu0 0.0
    %1842 = vmatpush.msra.mxu0 0.0
    %1843 = vmatpush.msra.mxu0 0.0
    %1844 = vmatpush.msra.mxu0 0.0
    %1845 = vmatpush.msra.mxu0 0.0
    %1846 = vmatpush.msra.mxu0 %v1825
    %1847 = vmatpush.msra.mxu0 %v1824
    %1848 = vmatpush.msra.mxu0 %v1823
    %1849 = vmatpush.msra.mxu0 %v1822
    %1850 = vmatpush.msra.mxu0 %v1821
    %1851 = vmatpush.msra.mxu0 %v1820
    %1852 = vmatpush.msra.mxu0 %v1819
    %1853 = vmatpush.msra.mxu0 %v1818
    %1854 = vmatmul.f32.gmra.mxu0 %v1827
    %v1855 = vpop.f32.mrf.mxu0
    %v1856 = vadd.f32 0.0, %v1855
    %1857 = vmatmul.f32.gmra.mxu0 %v1830
    %v1858 = vpop.f32.mrf.mxu0
    %v1859 = vadd.f32 0.0, %v1858
    %1860 = vmatmul.f32.gmra.mxu0 %v1833
    %v1861 = vpop.f32.mrf.mxu0
    %v1862 = vadd.f32 0.0, %v1861
    %1863 = vmatmul.f32.gmra.mxu0 %v1836
    %v1864 = vpop.f32.mrf.mxu0
    %v1865 = vadd.f32 0.0, %v1864
    %1866 = vdwg.mxu0
    %s1867 = scalar_lea.vmem %s11, 1
    %v1868 = vld [vmem:[%s1867] sm:$0x1]
    %s1869 = scalar_lea.vmem %s12, 1
    %v1870 = vld [vmem:[%s1869] sm:$0x1]
    %v1871 = vsel %vm163, %v1856, 0.0
    %1872 = vadd.xlane.f32.xlu0 %v1871
    %v1873 = vpop.xlane.xlu0 %1872
    %v1874 = vsel %vm163, %v1859, 0.0
    %1875 = vadd.xlane.f32.xlu0 %v1874
    %v1876 = vpop.xlane.xlu0 %1875
    %v1877 = vsel %vm163, %v1862, 0.0
    %1878 = vadd.xlane.f32.xlu0 %v1877
    %v1879 = vpop.xlane.xlu0 %1878
    %v1880 = vsel %vm163, %v1865, 0.0
    %1881 = vadd.xlane.f32.xlu0 %v1880
    %v1882 = vpop.xlane.xlu0 %1881
    %v1883 = vmul.f32 %v1873, %v732
    %v1884 = vmul.f32 %v1876, %v732
    %v1885 = vmul.f32 %v1879, %v732
    %v1886 = vmul.f32 %v1882, %v732
    %v1887 = vmul.f32 %v1856, %v1856
    %v1888 = vmul.f32 %v1859, %v1859
    %v1889 = vmul.f32 %v1862, %v1862
    %v1890 = vmul.f32 %v1865, %v1865
    %v1891 = vsel %vm163, %v1887, 0.0
    %1892 = vadd.xlane.f32.xlu0 %v1891
    %v1893 = vpop.xlane.xlu0 %1892
    %v1894 = vsel %vm163, %v1888, 0.0
    %1895 = vadd.xlane.f32.xlu0 %v1894
    %v1896 = vpop.xlane.xlu0 %1895
    %v1897 = vsel %vm163, %v1889, 0.0
    %1898 = vadd.xlane.f32.xlu0 %v1897
    %v1899 = vpop.xlane.xlu0 %1898
    %v1900 = vsel %vm163, %v1890, 0.0
    %1901 = vadd.xlane.f32.xlu0 %v1900
    %v1902 = vpop.xlane.xlu0 %1901
    %v1903 = vmul.f32 %v1893, %v732
    %v1904 = vmul.f32 %v1896, %v732
    %v1905 = vmul.f32 %v1899, %v732
    %v1906 = vmul.f32 %v1902, %v732
    %v1907 = vmul.f32 %v1883, %v1883
    %v1908 = vmul.f32 %v1884, %v1884
    %v1909 = vmul.f32 %v1885, %v1885
    %v1910 = vmul.f32 %v1886, %v1886
    %v1911 = vsub.f32 %v1903, %v1907
    %v1912 = vsub.f32 %v1904, %v1908
    %v1913 = vsub.f32 %v1905, %v1909
    %v1914 = vsub.f32 %v1906, %v1910
    %v1915 = vsub.f32 %v1856, %v1883
    %v1916 = vsub.f32 %v1859, %v1884
    %v1917 = vsub.f32 %v1862, %v1885
    %v1918 = vsub.f32 %v1865, %v1886
    %v1919 = vadd.f32 %v1911, 1e-05
    %v1920 = vadd.f32 %v1912, 1e-05
    %v1921 = vadd.f32 %v1913, 1e-05
    %v1922 = vadd.f32 %v1914, 1e-05
    %v1923 = vrsqrt.pop %v1919
    %v1924 = vmul.f32 %v1923, %v1919
    %v1925 = vmul.f32 %v1924, %v1923
    %v1926 = vmul.f32 0.5, %v1925
    %v1927 = vsub.f32 1.5, %v1926
    %v1928 = vmul.f32 %v1923, %v1927
    %vm1929 = vweird.f32 %v1919
    %vm1930 = vweird.f32 %v1923
    %vm1931 = vmor %vm1929, %vm1930
    %v1932 = vsel %vm1931, %v1923, %v1928
    %v1933 = vrsqrt.pop %v1920
    %v1934 = vmul.f32 %v1933, %v1920
    %v1935 = vmul.f32 %v1934, %v1933
    %v1936 = vmul.f32 0.5, %v1935
    %v1937 = vsub.f32 1.5, %v1936
    %v1938 = vmul.f32 %v1933, %v1937
    %vm1939 = vweird.f32 %v1920
    %vm1940 = vweird.f32 %v1933
    %vm1941 = vmor %vm1939, %vm1940
    %v1942 = vsel %vm1941, %v1933, %v1938
    %v1943 = vrsqrt.pop %v1921
    %v1944 = vmul.f32 %v1943, %v1921
    %v1945 = vmul.f32 %v1944, %v1943
    %v1946 = vmul.f32 0.5, %v1945
    %v1947 = vsub.f32 1.5, %v1946
    %v1948 = vmul.f32 %v1943, %v1947
    %vm1949 = vweird.f32 %v1921
    %vm1950 = vweird.f32 %v1943
    %vm1951 = vmor %vm1949, %vm1950
    %v1952 = vsel %vm1951, %v1943, %v1948
    %v1953 = vrsqrt.pop %v1922
    %v1954 = vmul.f32 %v1953, %v1922
    %v1955 = vmul.f32 %v1954, %v1953
    %v1956 = vmul.f32 0.5, %v1955
    %v1957 = vsub.f32 1.5, %v1956
    %v1958 = vmul.f32 %v1953, %v1957
    %vm1959 = vweird.f32 %v1922
    %vm1960 = vweird.f32 %v1953
    %vm1961 = vmor %vm1959, %vm1960
    %v1962 = vsel %vm1961, %v1953, %v1958
    %v1963 = vmul.f32 %v1915, %v1932
    %v1964 = vmul.f32 %v1916, %v1942
    %v1965 = vmul.f32 %v1917, %v1952
    %v1966 = vmul.f32 %v1918, %v1962
    %v1968 = vperm.slane %v1868, 0
    %v1970 = vmul.f32 %v1963, %v1968
    %v1971 = vmul.f32 %v1964, %v1968
    %v1972 = vmul.f32 %v1965, %v1968
    %v1973 = vmul.f32 %v1966, %v1968
    %v1975 = vperm.slane %v1870, 0
    %v1977 = vadd.f32 %v1970, %v1975
    %v1978 = vadd.f32 %v1971, %v1975
    %v1979 = vadd.f32 %v1972, %v1975
    %v1980 = vadd.f32 %v1973, %v1975
    %v1981 = vadd.f32 %v1075, %v1977
    %v1982 = vadd.f32 %v1076, %v1978
    %v1983 = vadd.f32 %v1077, %v1979
    %v1984 = vadd.f32 %v1078, %v1980
    %1985 = vst.msk [vmem:[#allocation13] sm:$0xff] %vm163, %v1981
    %1986 = vst.msk [vmem:[#allocation13 + $0x8] sm:$0xff] %vm163, %v1982
    %1987 = vst.msk [vmem:[#allocation13 + $0x10] sm:$0xff] %vm163, %v1983
    %1988 = vst.msk [vmem:[#allocation13 + $0x18] sm:$0xff] %vm163, %v1984
    // Predicated region
    $region78: #{tpu_custom_call.1} parent=1 // pred_check
      _
    $region79: #{tpu_custom_call.1} parent=1 // pred_check_branch
      %1990 = sbr.rel (0) target = $region81
    $region80: #{tpu_custom_call.1} parent=1 // pred_region
      %1992 = vsyncadd [#allocation4], 0
      %s1993 = sshll.u32 [#allocation13], 4
      %s1994 = int_to_ptr.vmem [resolvable:$true] %s1993
      %s1995 = sshll.u32 %s13, 4
      %s1996 = int_to_ptr.hbm [resolvable:$true] %s1995
      %2001 = dma.vmem_to_hbm [thread:$0]  %s1994, 512, %s1996, [#allocation4], 128, 128, 8
    $region81: #{tpu_custom_call.1} parent=1 // pred_fallthru
      _
    // Predicated region
    $region82: #{tpu_custom_call.1} parent=1 // pred_check
      _
    $region83: #{tpu_custom_call.1} parent=1 // pred_check_branch
      %2003 = sbr.rel (0) target = $region85
    $region84: #{tpu_custom_call.1} parent=1 // pred_region
      %2005 = dma.done [#allocation4], 512
    $region85: #{tpu_custom_call.1} parent=1 // pred_fallthru
      _
    %2006 = vsyncpa [#allocation3], 1
    %2007 = vsyncpa [#allocation6], 1
    %2008 = vsyncpa [#allocation9], 1
    %2009 = vsyncpa [#allocation12], 1
    %2010 = vsyncpa [#allocation4], 1

</llo_original>
